<compile_context>
chip_gen: v7x
topology: tpu7x:2x2x1
jax: 0.10.0
libtpu: 0.0.40
codegen_flags: <defaults>
</compile_context>

<pallas_src>
import functools
import math

import jax
import jax.numpy as jnp
from jax.experimental import pallas as pl
from jax.experimental.pallas import tpu as pltpu


# ---------------------------------------------------------------------------
# in-kernel helpers
# ---------------------------------------------------------------------------
def _gelu_tanh(x):
    # PyTorch "gelu_pytorch_tanh" activation (Idefics2 vision hidden_act)
    c = math.sqrt(2.0 / math.pi)
    return 0.5 * x * (1.0 + jnp.tanh(c * (x + 0.044715 * x * x * x)))


def _layer_norm(x, gamma, beta, eps):
    # nn.LayerNorm over last dim, biased variance, f32 statistics
    mean = jnp.mean(x, axis=-1, keepdims=True)
    var = jnp.mean((x - mean) ** 2, axis=-1, keepdims=True)
    return (x - mean) * jax.lax.rsqrt(var + eps) * gamma + beta


# ---------------------------------------------------------------------------
# wrapper-level helpers
# ---------------------------------------------------------------------------
def _vmem_capacity_bytes():
    try:
        cap = getattr(pltpu.get_tpu_info(), "vmem_capacity_bytes", None)
        if cap:
            return int(cap)
    except Exception:
        pass
    return 128 * 1024 * 1024


def _pick_tile(dim, target, align=8):
    """Largest tile <= target that divides `dim` and is a multiple of `align`."""
    if dim <= target:
        return dim
    start = (min(target, dim) // align) * align
    for t in range(start, align - 1, -align):
        if dim % t == 0:
            return t
    return dim


# ---------------------------------------------------------------------------
# Kernel 1: LN1 + fused QKV projection, per-head (B, H, S, hd) outputs
# ---------------------------------------------------------------------------
def _ln_qkv_kernel(x_ref, g_ref, b_ref, wqkv_ref, bqkv_ref,
                   q_ref, k_ref, v_ref, *, eps, head_dim, compute_dtype):
    x = x_ref[0].astype(jnp.float32)                                 # (tr, D)
    h = _layer_norm(x, g_ref[0], b_ref[0], eps).astype(compute_dtype)

    # fused QKV: one weight DMA stream / one wide-N MXU matmul; weights are already
    # compute_dtype and the softmax scale is pre-folded into the Q columns.
    qkv = jnp.dot(h, wqkv_ref[...], preferred_element_type=jnp.float32) + bqkv_ref[0]

    D = x.shape[-1]
    H = q_ref.shape[1]
    # static lane slices -> per-head outputs directly in (B, H, S, hd) layout
    # (avoids XLA (B,S,D)->(B,H,S,hd) transpose round trips through HBM).
    for hh in range(H):
        lo = hh * head_dim
        hi = lo + head_dim
        q_ref[0, hh] = qkv[:, lo:hi].astype(q_ref.dtype)
        k_ref[0, hh] = qkv[:, D + lo:D + hi].astype(k_ref.dtype)
        v_ref[0, hh] = qkv[:, 2 * D + lo:2 * D + hi].astype(v_ref.dtype)


# ---------------------------------------------------------------------------
# Kernel 2: flash attention, head axis in the grid (online softmax over KV tiles)
# ---------------------------------------------------------------------------
def _flash_attn_kernel(q_ref, k_ref, v_ref, o_ref,
                       m_sc, l_sc, acc_sc, *, compute_dtype, exact_recip):
    ki = pl.program_id(3)

    @pl.when(ki == 0)
    def _():
        m_sc[...] = jnp.full(m_sc.shape, -jnp.inf, m_sc.dtype)
        l_sc[...] = jnp.zeros(l_sc.shape, l_sc.dtype)
        acc_sc[...] = jnp.zeros(acc_sc.shape, acc_sc.dtype)

    q = q_ref[0, 0]                       # (tq, hd)  (scale pre-folded, compute dtype)
    k = k_ref[0, 0]                       # (tk, hd)
    v = v_ref[0, 0]                       # (tk, hd)

    s = jnp.einsum("qd,kd->qk", q, k, preferred_element_type=jnp.float32)  # (tq, tk)
    m_new = jnp.maximum(m_sc[...], jnp.max(s, axis=-1, keepdims=True))
    alpha = jnp.exp(m_sc[...] - m_new)
    p = jnp.exp(s - m_new)
    l_sc[...] = alpha * l_sc[...] + jnp.sum(p, axis=-1, keepdims=True)
    acc_sc[...] = alpha * acc_sc[...] + jnp.dot(
        p.astype(compute_dtype), v, preferred_element_type=jnp.float32)
    m_sc[...] = m_new

    @pl.when(ki == pl.num_programs(3) - 1)
    def _():
        inv_l = pl.reciprocal(l_sc[...], approx=not exact_recip)     # EUP
        o_ref[0, 0] = (acc_sc[...] * inv_l).astype(o_ref.dtype)


# ---------------------------------------------------------------------------
# Kernel 3: head merge + out_proj + residual + LN2 + MLP (+ residual)
# ---------------------------------------------------------------------------
def _out_mlp_kernel(x_ref, a_ref, wo_ref, bo_ref, g2_ref, bln2_ref,
                    w1_ref, b1_ref, w2_ref, b2_ref,
                    out_ref, y_sc, h2_sc, acc_sc, *, eps, compute_dtype):
    ki = pl.program_id(2)

    @pl.when(ki == 0)
    def _():
        H = a_ref.shape[1]
        # merge heads in-kernel (attention arrives in (1, H, tr, hd) layout)
        a = jnp.concatenate([a_ref[0, hh] for hh in range(H)], axis=-1)   # (tr, D)
        attn = jnp.dot(a, wo_ref[...], preferred_element_type=jnp.float32) + bo_ref[0]
        y = x_ref[0].astype(jnp.float32) + attn                           # residual 1
        y_sc[...] = y
        h2_sc[...] = _layer_norm(y, g2_ref[0], bln2_ref[0], eps).astype(h2_sc.dtype)
        acc_sc[...] = jnp.zeros(acc_sc.shape, acc_sc.dtype)

    # fc1 column tile / fc2 row tile (resident in VMEM when block_i == I,
    # streamed over the trailing grid axis otherwise)
    t = jnp.dot(h2_sc[...], w1_ref[...], preferred_element_type=jnp.float32) + b1_ref[0]
    t = _gelu_tanh(t.astype(compute_dtype))        # bf16 VALU/EUP on v6e/v7x
    acc_sc[...] += jnp.dot(t, w2_ref[...], preferred_element_type=jnp.float32)

    @pl.when(ki == pl.num_programs(2) - 1)
    def _():
        out_ref[0] = (y_sc[...] + acc_sc[...] + b2_ref[0]).astype(out_ref.dtype)


# ---------------------------------------------------------------------------
# wrapper
# ---------------------------------------------------------------------------
def idefics2_encoder_layer(x, params, num_heads, *, eps=1e-6,
                           compute_dtype=jnp.bfloat16,
                           block_rows=None, block_q=None, block_kv=None,
                           block_i=None, vmem_limit_bytes=None,
                           single_buffer_weights=True):
    B, S, D = x.shape
    assert D % num_heads == 0
    H = num_heads
    hd = D // H
    scale = hd ** (-0.5)
    I = params["w1"].shape[1]
    itemsize = jnp.dtype(compute_dtype).itemsize

    # --- generation-aware VMEM budget & tile defaults ----------------------
    vmem_cap = _vmem_capacity_bytes()
    small_vmem = vmem_cap <= 64 * 1024 * 1024          # e.g. v7x (64 MiB / TC)
    if vmem_limit_bytes is None:
        vmem_limit_bytes = min(int(vmem_cap * 0.8), 100 * 1024 * 1024)

    if block_rows is None:
        block_rows = _pick_tile(S, 256 if small_vmem else 512)
    if block_q is None:
        block_q = _pick_tile(S, 256 if small_vmem else 512)
    if block_kv is None:
        block_kv = _pick_tile(S, 512)
    if block_i is None:
        mlp_w_bytes = 2 * D * I * itemsize
        budget = (20 << 20) if small_vmem else (48 << 20)
        block_i = I if mlp_w_bytes <= budget else _pick_tile(I, 512, align=128)

    for blk in (block_rows, block_q, block_kv):
        assert S % blk == 0 and (blk == S or blk % 8 == 0)
    assert I % block_i == 0 and (block_i == I or block_i % 128 == 0)

    # --- prepare weights once in HBM (in serving: pre-cast at load time) ---
    # bf16 MXU operands; softmax scale folded into the Q columns of wqkv/bqkv.
    scale_cols = jnp.concatenate([jnp.full((D,), scale, jnp.float32),
                                  jnp.ones((2 * D,), jnp.float32)])
    wqkv = (params["wqkv"].astype(jnp.float32) * scale_cols[None, :]).astype(compute_dtype)
    bqkv = params["bqkv"].astype(jnp.float32) * scale_cols[None, :]
    wo = params["wo"].astype(compute_dtype)
    w1 = params["w1"].astype(compute_dtype)
    w2 = params["w2"].astype(compute_dtype)
    # biases / LN params stay f32: negligible bytes, exact f32 epilogue math.

    R = S // block_rows
    QT = S // block_q
    KVT = S // block_kv
    KI = I // block_i

    def const_spec(shape, index_map):
        # constant-index weight/bias blocks: never re-DMA'd, so a second pipeline
        # buffer is pure VMEM waste -> single-buffer when supported.
        if single_buffer_weights:
            return pl.BlockSpec(shape, index_map, pipeline_mode=pl.Buffered(1))
        return pl.BlockSpec(shape, index_map)

    # ------------------------- stage 1: LN1 + fused QKV --------------------
    def _c2(shape):
        return const_spec(shape, lambda b, r: (0,) * len(shape))

    qkv_out_shape = jax.ShapeDtypeStruct((B, H, S, hd), compute_dtype)
    qkv_out_spec = pl.BlockSpec((1, H, block_rows, hd), lambda b, r: (b, 0, r, 0))

    q4, k4, v4 = pl.pallas_call(
        functools.partial(_ln_qkv_kernel, eps=eps, head_dim=hd,
                          compute_dtype=compute_dtype),
        out_shape=(qkv_out_shape, qkv_out_shape, qkv_out_shape),
        grid_spec=pltpu.PrefetchScalarGridSpec(
            num_scalar_prefetch=0,
            grid=(B, R),
            in_specs=[
                pl.BlockSpec((1, block_rows, D), lambda b, r: (b, r, 0)),   # x
                _c2((1, D)), _c2((1, D)),                                   # ln1 g/b
                _c2((D, 3 * D)), _c2((1, 3 * D)),                           # fused QKV
            ],
            out_specs=[qkv_out_spec, qkv_out_spec, qkv_out_spec],
        ),
        compiler_params=pltpu.CompilerParams(
            dimension_semantics=("parallel", "parallel"),
            vmem_limit_bytes=vmem_limit_bytes),
    )(x, params["ln1_g"], params["ln1_b"], wqkv, bqkv)

    # ------------------------- stage 2: flash attention --------------------
    o4 = pl.pallas_call(
        functools.partial(_flash_attn_kernel, compute_dtype=compute_dtype,
                          exact_recip=(compute_dtype == jnp.float32)),
        out_shape=jax.ShapeDtypeStruct((B, H, S, hd), compute_dtype),
        grid_spec=pltpu.PrefetchScalarGridSpec(
            num_scalar_prefetch=0,
            grid=(B, H, QT, KVT),
            in_specs=[
                pl.BlockSpec((1, 1, block_q, hd), lambda b, h, qi, ki: (b, h, qi, 0)),
                pl.BlockSpec((1, 1, block_kv, hd), lambda b, h, qi, ki: (b, h, ki, 0)),
                pl.BlockSpec((1, 1, block_kv, hd), lambda b, h, qi, ki: (b, h, ki, 0)),
            ],
            out_specs=pl.BlockSpec((1, 1, block_q, hd),
                                   lambda b, h, qi, ki: (b, h, qi, 0)),
            scratch_shapes=[
                pltpu.VMEM((block_q, 1), jnp.float32),     # running max
                pltpu.VMEM((block_q, 1), jnp.float32),     # running sum
                pltpu.VMEM((block_q, hd), jnp.float32),    # accumulator
            ],
        ),
        compiler_params=pltpu.CompilerParams(
            dimension_semantics=("parallel", "parallel", "parallel", "arbitrary"),
            vmem_limit_bytes=vmem_limit_bytes),
    )(q4, k4, v4)

    # --------------- stage 3: out_proj + LN2 + MLP (+ residuals) -----------
    def _c3(shape):
        return const_spec(shape, lambda b, r, ki: (0,) * len(shape))

    if block_i == I:
        # MLP weights fully resident in VMEM: no per-row-tile re-streaming from HBM.
        w1_spec = _c3((D, I))
        b1_spec = _c3((1, I))
        w2_spec = _c3((I, D))
    else:
        w1_spec = pl.BlockSpec((D, block_i), lambda b, r, ki: (0, ki))
        b1_spec = pl.BlockSpec((1, block_i), lambda b, r, ki: (0, ki))
        w2_spec = pl.BlockSpec((block_i, D), lambda b, r, ki: (ki, 0))

    out = pl.pallas_call(
        functools.partial(_out_mlp_kernel, eps=eps, compute_dtype=compute_dtype),
        out_shape=jax.ShapeDtypeStruct((B, S, D), x.dtype),
        grid_spec=pltpu.PrefetchScalarGridSpec(
            num_scalar_prefetch=0,
            grid=(B, R, KI),
            in_specs=[
                pl.BlockSpec((1, block_rows, D), lambda b, r, ki: (b, r, 0)),       # x
                pl.BlockSpec((1, H, block_rows, hd), lambda b, r, ki: (b, 0, r, 0)),  # attn
                _c3((D, D)), _c3((1, D)),                 # out_proj
                _c3((1, D)), _c3((1, D)),                 # ln2 gamma/beta
                w1_spec, b1_spec, w2_spec,                # fc1 / fc2
                _c3((1, D)),                              # fc2 bias
            ],
            out_specs=pl.BlockSpec((1, block_rows, D), lambda b, r, ki: (b, r, 0)),
            scratch_shapes=[
                pltpu.VMEM((block_rows, D), jnp.float32),    # residual-1 output
                pltpu.VMEM((block_rows, D), compute_dtype),  # LN2 output
                pltpu.VMEM((block_rows, D), jnp.float32),    # fc2 accumulator
            ],
        ),
        compiler_params=pltpu.CompilerParams(
            dimension_semantics=("parallel", "parallel", "arbitrary"),
            vmem_limit_bytes=vmem_limit_bytes),
    )(x, o4, wo, params["bo"], params["ln2_g"], params["ln2_b"],
      w1, params["b1"], w2, params["b2"])

    return out


# ---------------------------------------------------------------------------
# pure-JAX reference (mirrors the PyTorch forward) for verification
# ---------------------------------------------------------------------------
def reference_encoder_layer(x, p, num_heads, eps=1e-6):
    B, S, D = x.shape
    hd = D // num_heads
    scale = hd ** (-0.5)

    def ln(y, g, b):
        m = jnp.mean(y, axis=-1, keepdims=True)
        v = jnp.mean((y - m) ** 2, axis=-1, keepdims=True)
        return (y - m) * jax.lax.rsqrt(v + eps) * g + b

    h = ln(x, p["ln1_g"][0], p["ln1_b"][0])
    qkv = h @ p["wqkv"] + p["bqkv"][0]
    q, k, v = jnp.split(qkv, 3, axis=-1)
    q = q.reshape(B, S, num_heads, hd)
    k = k.reshape(B, S, num_heads, hd)
    v = v.reshape(B, S, num_heads, hd)
    s = jnp.einsum("bqhd,bkhd->bhqk", q, k) * scale
    a = jax.nn.softmax(s, axis=-1)
    o = jnp.einsum("bhqk,bkhd->bqhd", a, v).reshape(B, S, D)
    o = o @ p["wo"] + p["bo"][0]
    x = x + o

    h = ln(x, p["ln2_g"][0], p["ln2_b"][0])
    h = h @ p["w1"] + p["b1"][0]
    c = math.sqrt(2.0 / math.pi)
    h = 0.5 * h * (1.0 + jnp.tanh(c * (h + 0.044715 * h ** 3)))
    h = h @ p["w2"] + p["b2"][0]
    return x + h


# ---------------------------------------------------------------------------
# main
# ---------------------------------------------------------------------------
if __name__ == "__main__":
    B, S, D = 2, 16, 32          # batch, seq_len, hidden_size
    NUM_HEADS = 4                # head_dim = 8
    I = 256                      # intermediate_size
    EPS = 1e-6

    key = jax.random.PRNGKey(0)
    ks = jax.random.split(key, 8)

    x = jax.random.normal(ks[0], (B, S, D), dtype=jnp.float32)

    params = {
        "ln1_g": jnp.ones((1, D), jnp.float32),
        "ln1_b": jnp.zeros((1, D), jnp.float32),
        "wqkv":  0.02 * jax.random.normal(ks[1], (D, 3 * D), jnp.float32),
        "bqkv":  0.01 * jax.random.normal(ks[2], (1, 3 * D), jnp.float32),
        "wo":    0.02 * jax.random.normal(ks[3], (D, D), jnp.float32),
        "bo":    0.01 * jax.random.normal(ks[4], (1, D), jnp.float32),
        "ln2_g": jnp.ones((1, D), jnp.float32),
        "ln2_b": jnp.zeros((1, D), jnp.float32),
        "w1":    0.02 * jax.random.normal(ks[5], (D, I), jnp.float32),
        "b1":    0.01 * jax.random.normal(ks[6], (1, I), jnp.float32),
        "w2":    0.02 * jax.random.normal(ks[7], (I, D), jnp.float32),
        "b2":    jnp.zeros((1, D), jnp.float32),
    }

    ref = reference_encoder_layer(x, params, NUM_HEADS, eps=EPS)

    def _run(single_buffer_weights):
        # f32-operand run with small explicit tiles + streamed MLP: exercises the
        # multi-tile flash-attention grid and the streamed-intermediate path.
        o32 = idefics2_encoder_layer(
            x, params, NUM_HEADS, eps=EPS, compute_dtype=jnp.float32,
            block_rows=8, block_q=8, block_kv=8, block_i=128,
            single_buffer_weights=single_buffer_weights)
        o32 = jax.block_until_ready(o32)
        # bf16-operand run with VMEM-derived defaults (resident MLP weights).
        o16 = idefics2_encoder_layer(
            x, params, NUM_HEADS, eps=EPS, compute_dtype=jnp.bfloat16,
            single_buffer_weights=single_buffer_weights)
        o16 = jax.block_until_ready(o16)
        return o32, o16

    try:
        out_f32, out_bf16 = _run(True)
    except Exception:
        # pl.Buffered(1) (single-buffered constant weights) not supported on this
        # JAX build -- fall back to default double buffering (costs VMEM only,
        # semantics identical).
        out_f32, out_bf16 = _run(False)

    assert out_f32.shape == (B, S, D)
    assert jnp.allclose(out_f32, ref, rtol=2e-3, atol=2e-3), "f32 mismatch vs reference"
    assert out_bf16.shape == (B, S, D)
    assert jnp.allclose(out_bf16, ref, rtol=2e-2, atol=2e-2), "bf16 mismatch vs reference"

    print("KERNEL_OK")
</pallas_src>

<mosaic_0001>
module attributes {stable_mosaic.version = 11 : i64} {
  func.func @_ln_qkv_kernel(%arg0: i32, %arg1: i32, %arg2: memref<1x8x32xf32, #tpu.memory_space<vmem>>, %arg3: memref<1x32xf32, #tpu.memory_space<vmem>>, %arg4: memref<1x32xf32, #tpu.memory_space<vmem>>, %arg5: memref<32x96xf32, #tpu.memory_space<vmem>>, %arg6: memref<1x96xf32, #tpu.memory_space<vmem>>, %arg7: memref<1x4x8x8xf32, #tpu.memory_space<vmem>>, %arg8: memref<1x4x8x8xf32, #tpu.memory_space<vmem>>, %arg9: memref<1x4x8x8xf32, #tpu.memory_space<vmem>>) attributes {dimension_semantics = [#tpu.dimension_semantics<parallel>, #tpu.dimension_semantics<parallel>], iteration_bounds = array<i64: 2, 2>, scalar_prefetch = 0 : i64, scratch_operands = 0 : i64, tpu.core_type = #tpu.core_type<tc>, window_params = [{transform_indices = @transform_0, window_bounds = array<i64: 1, 8, 32>}, {pipeline_mode = #tpu.pipeline_mode<synchronous>, transform_indices = @transform_1, window_bounds = array<i64: 1, 32>}, {pipeline_mode = #tpu.pipeline_mode<synchronous>, transform_indices = @transform_2, window_bounds = array<i64: 1, 32>}, {pipeline_mode = #tpu.pipeline_mode<synchronous>, transform_indices = @transform_3, window_bounds = array<i64: 32, 96>}, {pipeline_mode = #tpu.pipeline_mode<synchronous>, transform_indices = @transform_4, window_bounds = array<i64: 1, 96>}, {transform_indices = @transform_5, window_bounds = array<i64: 1, 4, 8, 8>}, {transform_indices = @transform_6, window_bounds = array<i64: 1, 4, 8, 8>}, {transform_indices = @transform_7, window_bounds = array<i64: 1, 4, 8, 8>}]} {
    %c0 = arith.constant 0 : index
    %c0_0 = arith.constant 0 : index
    %c0_1 = arith.constant 0 : index
    %0 = vector.load %arg2[%c0, %c0_0, %c0_1] : memref<1x8x32xf32, #tpu.memory_space<vmem>>, vector<1x8x32xf32>
    %1 = vector.shape_cast %0 : vector<1x8x32xf32> to vector<8x32xf32>
    %c0_2 = arith.constant 0 : index
    %c0_3 = arith.constant 0 : index
    %2 = vector.load %arg3[%c0_2, %c0_3] : memref<1x32xf32, #tpu.memory_space<vmem>>, vector<1x32xf32>
    %3 = vector.shape_cast %2 : vector<1x32xf32> to vector<32xf32>
    %c0_4 = arith.constant 0 : index
    %c0_5 = arith.constant 0 : index
    %4 = vector.load %arg4[%c0_4, %c0_5] : memref<1x32xf32, #tpu.memory_space<vmem>>, vector<1x32xf32>
    %5 = vector.shape_cast %4 : vector<1x32xf32> to vector<32xf32>
    %cst = arith.constant dense<0.000000e+00> : vector<8xf32>
    %6 = vector.multi_reduction <add>, %1, %cst [1] : vector<8x32xf32> to vector<8xf32>
    %7 = vector.shape_cast %6 : vector<8xf32> to vector<8x1xf32>
    %cst_6 = arith.constant 3.200000e+01 : f32
    %8 = vector.broadcast %cst_6 : f32 to vector<8x1xf32>
    %9 = arith.divf %7, %8 : vector<8x1xf32>
    %10 = vector.broadcast %9 : vector<8x1xf32> to vector<8x32xf32>
    %11 = arith.subf %1, %10 : vector<8x32xf32>
    %12 = arith.mulf %11, %11 : vector<8x32xf32>
    %cst_7 = arith.constant dense<0.000000e+00> : vector<8xf32>
    %13 = vector.multi_reduction <add>, %12, %cst_7 [1] : vector<8x32xf32> to vector<8xf32>
    %14 = vector.shape_cast %13 : vector<8xf32> to vector<8x1xf32>
    %cst_8 = arith.constant 3.200000e+01 : f32
    %15 = vector.broadcast %cst_8 : f32 to vector<8x1xf32>
    %16 = arith.divf %14, %15 : vector<8x1xf32>
    %17 = vector.broadcast %9 : vector<8x1xf32> to vector<8x32xf32>
    %18 = arith.subf %1, %17 : vector<8x32xf32>
    %cst_9 = arith.constant 9.99999997E-7 : f32
    %19 = vector.broadcast %cst_9 : f32 to vector<8x1xf32>
    %20 = arith.addf %16, %19 : vector<8x1xf32>
    %21 = math.rsqrt %20 : vector<8x1xf32>
    %22 = vector.broadcast %21 : vector<8x1xf32> to vector<8x32xf32>
    %23 = arith.mulf %18, %22 : vector<8x32xf32>
    %24 = vector.shape_cast %3 : vector<32xf32> to vector<1x32xf32>
    %25 = vector.broadcast %24 : vector<1x32xf32> to vector<8x32xf32>
    %26 = arith.mulf %23, %25 : vector<8x32xf32>
    %27 = vector.shape_cast %5 : vector<32xf32> to vector<1x32xf32>
    %28 = vector.broadcast %27 : vector<1x32xf32> to vector<8x32xf32>
    %29 = arith.addf %26, %28 : vector<8x32xf32>
    %c0_10 = arith.constant 0 : index
    %c0_11 = arith.constant 0 : index
    %30 = vector.load %arg5[%c0_10, %c0_11] : memref<32x96xf32, #tpu.memory_space<vmem>>, vector<32x96xf32>
    %cst_12 = arith.constant dense<0.000000e+00> : vector<8x96xf32>
    %31 = tpu.matmul %29, %30, %cst_12 {dimension_numbers = #tpu.dot_dimension_numbers<[1], [0], [0], [1], [0, 0, 1, 1], [], []>} : vector<8x32xf32>, vector<32x96xf32>, vector<8x96xf32> -> vector<8x96xf32>
    %c0_13 = arith.constant 0 : index
    %c0_14 = arith.constant 0 : index
    %32 = vector.load %arg6[%c0_13, %c0_14] : memref<1x96xf32, #tpu.memory_space<vmem>>, vector<1x96xf32>
    %33 = vector.shape_cast %32 : vector<1x96xf32> to vector<96xf32>
    %34 = vector.shape_cast %33 : vector<96xf32> to vector<1x96xf32>
    %35 = vector.broadcast %34 : vector<1x96xf32> to vector<8x96xf32>
    %36 = arith.addf %31, %35 : vector<8x96xf32>
    %37 = vector.extract_strided_slice %36 {offsets = [0, 0], sizes = [8, 8], strides = [1, 1]} : vector<8x96xf32> to vector<8x8xf32>
    %c0_15 = arith.constant 0 : index
    %c0_16 = arith.constant 0 : index
    %c0_17 = arith.constant 0 : index
    %c0_18 = arith.constant 0 : index
    %38 = vector.load %arg7[%c0_15, %c0_16, %c0_17, %c0_18] : memref<1x4x8x8xf32, #tpu.memory_space<vmem>>, vector<1x1x8x8xf32>
    %39 = vector.shape_cast %38 : vector<1x1x8x8xf32> to vector<8x8xf32>
    %40 = vector.shape_cast %37 : vector<8x8xf32> to vector<1x1x8x8xf32>
    tpu.vector_store %arg7[%c0_15, %c0_16, %c0_17, %c0_18], %40 {strides = array<i32>} : memref<1x4x8x8xf32, #tpu.memory_space<vmem>>, vector<1x1x8x8xf32>,
    %41 = vector.extract_strided_slice %36 {offsets = [0, 32], sizes = [8, 8], strides = [1, 1]} : vector<8x96xf32> to vector<8x8xf32>
    %c0_19 = arith.constant 0 : index
    %c0_20 = arith.constant 0 : index
    %c0_21 = arith.constant 0 : index
    %c0_22 = arith.constant 0 : index
    %42 = vector.load %arg8[%c0_19, %c0_20, %c0_21, %c0_22] : memref<1x4x8x8xf32, #tpu.memory_space<vmem>>, vector<1x1x8x8xf32>
    %43 = vector.shape_cast %42 : vector<1x1x8x8xf32> to vector<8x8xf32>
    %44 = vector.shape_cast %41 : vector<8x8xf32> to vector<1x1x8x8xf32>
    tpu.vector_store %arg8[%c0_19, %c0_20, %c0_21, %c0_22], %44 {strides = array<i32>} : memref<1x4x8x8xf32, #tpu.memory_space<vmem>>, vector<1x1x8x8xf32>,
    %45 = vector.extract_strided_slice %36 {offsets = [0, 64], sizes = [8, 8], strides = [1, 1]} : vector<8x96xf32> to vector<8x8xf32>
    %c0_23 = arith.constant 0 : index
    %c0_24 = arith.constant 0 : index
    %c0_25 = arith.constant 0 : index
    %c0_26 = arith.constant 0 : index
    %46 = vector.load %arg9[%c0_23, %c0_24, %c0_25, %c0_26] : memref<1x4x8x8xf32, #tpu.memory_space<vmem>>, vector<1x1x8x8xf32>
    %47 = vector.shape_cast %46 : vector<1x1x8x8xf32> to vector<8x8xf32>
    %48 = vector.shape_cast %45 : vector<8x8xf32> to vector<1x1x8x8xf32>
    tpu.vector_store %arg9[%c0_23, %c0_24, %c0_25, %c0_26], %48 {strides = array<i32>} : memref<1x4x8x8xf32, #tpu.memory_space<vmem>>, vector<1x1x8x8xf32>,
    %49 = vector.extract_strided_slice %36 {offsets = [0, 8], sizes = [8, 8], strides = [1, 1]} : vector<8x96xf32> to vector<8x8xf32>
    %c0_27 = arith.constant 0 : index
    %c1 = arith.constant 1 : index
    %c0_28 = arith.constant 0 : index
    %c0_29 = arith.constant 0 : index
    %50 = vector.load %arg7[%c0_27, %c1, %c0_28, %c0_29] : memref<1x4x8x8xf32, #tpu.memory_space<vmem>>, vector<1x1x8x8xf32>
    %51 = vector.shape_cast %50 : vector<1x1x8x8xf32> to vector<8x8xf32>
    %52 = vector.shape_cast %49 : vector<8x8xf32> to vector<1x1x8x8xf32>
    tpu.vector_store %arg7[%c0_27, %c1, %c0_28, %c0_29], %52 {strides = array<i32>} : memref<1x4x8x8xf32, #tpu.memory_space<vmem>>, vector<1x1x8x8xf32>,
    %53 = vector.extract_strided_slice %36 {offsets = [0, 40], sizes = [8, 8], strides = [1, 1]} : vector<8x96xf32> to vector<8x8xf32>
    %c0_30 = arith.constant 0 : index
    %c1_31 = arith.constant 1 : index
    %c0_32 = arith.constant 0 : index
    %c0_33 = arith.constant 0 : index
    %54 = vector.load %arg8[%c0_30, %c1_31, %c0_32, %c0_33] : memref<1x4x8x8xf32, #tpu.memory_space<vmem>>, vector<1x1x8x8xf32>
    %55 = vector.shape_cast %54 : vector<1x1x8x8xf32> to vector<8x8xf32>
    %56 = vector.shape_cast %53 : vector<8x8xf32> to vector<1x1x8x8xf32>
    tpu.vector_store %arg8[%c0_30, %c1_31, %c0_32, %c0_33], %56 {strides = array<i32>} : memref<1x4x8x8xf32, #tpu.memory_space<vmem>>, vector<1x1x8x8xf32>,
    %57 = vector.extract_strided_slice %36 {offsets = [0, 72], sizes = [8, 8], strides = [1, 1]} : vector<8x96xf32> to vector<8x8xf32>
    %c0_34 = arith.constant 0 : index
    %c1_35 = arith.constant 1 : index
    %c0_36 = arith.constant 0 : index
    %c0_37 = arith.constant 0 : index
    %58 = vector.load %arg9[%c0_34, %c1_35, %c0_36, %c0_37] : memref<1x4x8x8xf32, #tpu.memory_space<vmem>>, vector<1x1x8x8xf32>
    %59 = vector.shape_cast %58 : vector<1x1x8x8xf32> to vector<8x8xf32>
    %60 = vector.shape_cast %57 : vector<8x8xf32> to vector<1x1x8x8xf32>
    tpu.vector_store %arg9[%c0_34, %c1_35, %c0_36, %c0_37], %60 {strides = array<i32>} : memref<1x4x8x8xf32, #tpu.memory_space<vmem>>, vector<1x1x8x8xf32>,
    %61 = vector.extract_strided_slice %36 {offsets = [0, 16], sizes = [8, 8], strides = [1, 1]} : vector<8x96xf32> to vector<8x8xf32>
    %c0_38 = arith.constant 0 : index
    %c2 = arith.constant 2 : index
    %c0_39 = arith.constant 0 : index
    %c0_40 = arith.constant 0 : index
    %62 = vector.load %arg7[%c0_38, %c2, %c0_39, %c0_40] : memref<1x4x8x8xf32, #tpu.memory_space<vmem>>, vector<1x1x8x8xf32>
    %63 = vector.shape_cast %62 : vector<1x1x8x8xf32> to vector<8x8xf32>
    %64 = vector.shape_cast %61 : vector<8x8xf32> to vector<1x1x8x8xf32>
    tpu.vector_store %arg7[%c0_38, %c2, %c0_39, %c0_40], %64 {strides = array<i32>} : memref<1x4x8x8xf32, #tpu.memory_space<vmem>>, vector<1x1x8x8xf32>,
    %65 = vector.extract_strided_slice %36 {offsets = [0, 48], sizes = [8, 8], strides = [1, 1]} : vector<8x96xf32> to vector<8x8xf32>
    %c0_41 = arith.constant 0 : index
    %c2_42 = arith.constant 2 : index
    %c0_43 = arith.constant 0 : index
    %c0_44 = arith.constant 0 : index
    %66 = vector.load %arg8[%c0_41, %c2_42, %c0_43, %c0_44] : memref<1x4x8x8xf32, #tpu.memory_space<vmem>>, vector<1x1x8x8xf32>
    %67 = vector.shape_cast %66 : vector<1x1x8x8xf32> to vector<8x8xf32>
    %68 = vector.shape_cast %65 : vector<8x8xf32> to vector<1x1x8x8xf32>
    tpu.vector_store %arg8[%c0_41, %c2_42, %c0_43, %c0_44], %68 {strides = array<i32>} : memref<1x4x8x8xf32, #tpu.memory_space<vmem>>, vector<1x1x8x8xf32>,
    %69 = vector.extract_strided_slice %36 {offsets = [0, 80], sizes = [8, 8], strides = [1, 1]} : vector<8x96xf32> to vector<8x8xf32>
    %c0_45 = arith.constant 0 : index
    %c2_46 = arith.constant 2 : index
    %c0_47 = arith.constant 0 : index
    %c0_48 = arith.constant 0 : index
    %70 = vector.load %arg9[%c0_45, %c2_46, %c0_47, %c0_48] : memref<1x4x8x8xf32, #tpu.memory_space<vmem>>, vector<1x1x8x8xf32>
    %71 = vector.shape_cast %70 : vector<1x1x8x8xf32> to vector<8x8xf32>
    %72 = vector.shape_cast %69 : vector<8x8xf32> to vector<1x1x8x8xf32>
    tpu.vector_store %arg9[%c0_45, %c2_46, %c0_47, %c0_48], %72 {strides = array<i32>} : memref<1x4x8x8xf32, #tpu.memory_space<vmem>>, vector<1x1x8x8xf32>,
    %73 = vector.extract_strided_slice %36 {offsets = [0, 24], sizes = [8, 8], strides = [1, 1]} : vector<8x96xf32> to vector<8x8xf32>
    %c0_49 = arith.constant 0 : index
    %c3 = arith.constant 3 : index
    %c0_50 = arith.constant 0 : index
    %c0_51 = arith.constant 0 : index
    %74 = vector.load %arg7[%c0_49, %c3, %c0_50, %c0_51] : memref<1x4x8x8xf32, #tpu.memory_space<vmem>>, vector<1x1x8x8xf32>
    %75 = vector.shape_cast %74 : vector<1x1x8x8xf32> to vector<8x8xf32>
    %76 = vector.shape_cast %73 : vector<8x8xf32> to vector<1x1x8x8xf32>
    tpu.vector_store %arg7[%c0_49, %c3, %c0_50, %c0_51], %76 {strides = array<i32>} : memref<1x4x8x8xf32, #tpu.memory_space<vmem>>, vector<1x1x8x8xf32>,
    %77 = vector.extract_strided_slice %36 {offsets = [0, 56], sizes = [8, 8], strides = [1, 1]} : vector<8x96xf32> to vector<8x8xf32>
    %c0_52 = arith.constant 0 : index
    %c3_53 = arith.constant 3 : index
    %c0_54 = arith.constant 0 : index
    %c0_55 = arith.constant 0 : index
    %78 = vector.load %arg8[%c0_52, %c3_53, %c0_54, %c0_55] : memref<1x4x8x8xf32, #tpu.memory_space<vmem>>, vector<1x1x8x8xf32>
    %79 = vector.shape_cast %78 : vector<1x1x8x8xf32> to vector<8x8xf32>
    %80 = vector.shape_cast %77 : vector<8x8xf32> to vector<1x1x8x8xf32>
    tpu.vector_store %arg8[%c0_52, %c3_53, %c0_54, %c0_55], %80 {strides = array<i32>} : memref<1x4x8x8xf32, #tpu.memory_space<vmem>>, vector<1x1x8x8xf32>,
    %81 = vector.extract_strided_slice %36 {offsets = [0, 88], sizes = [8, 8], strides = [1, 1]} : vector<8x96xf32> to vector<8x8xf32>
    %c0_56 = arith.constant 0 : index
    %c3_57 = arith.constant 3 : index
    %c0_58 = arith.constant 0 : index
    %c0_59 = arith.constant 0 : index
    %82 = vector.load %arg9[%c0_56, %c3_57, %c0_58, %c0_59] : memref<1x4x8x8xf32, #tpu.memory_space<vmem>>, vector<1x1x8x8xf32>
    %83 = vector.shape_cast %82 : vector<1x1x8x8xf32> to vector<8x8xf32>
    %84 = vector.shape_cast %81 : vector<8x8xf32> to vector<1x1x8x8xf32>
    tpu.vector_store %arg9[%c0_56, %c3_57, %c0_58, %c0_59], %84 {strides = array<i32>} : memref<1x4x8x8xf32, #tpu.memory_space<vmem>>, vector<1x1x8x8xf32>,
    return
  }
  func.func @transform_0(%arg0: i32, %arg1: i32) -> (i32, i32, i32) {
    %c0_i32 = arith.constant 0 : i32
    %c0_i32_0 = arith.constant 0 : i32
    return %arg0, %arg1, %c0_i32 : i32, i32, i32
  }
  func.func @transform_1(%arg0: i32, %arg1: i32) -> (i32, i32) {
    %c0_i32 = arith.constant 0 : i32
    %c0_i32_0 = arith.constant 0 : i32
    %c0_i32_1 = arith.constant 0 : i32
    return %c0_i32, %c0_i32_0 : i32, i32
  }
  func.func @transform_2(%arg0: i32, %arg1: i32) -> (i32, i32) {
    %c0_i32 = arith.constant 0 : i32
    %c0_i32_0 = arith.constant 0 : i32
    %c0_i32_1 = arith.constant 0 : i32
    return %c0_i32, %c0_i32_0 : i32, i32
  }
  func.func @transform_3(%arg0: i32, %arg1: i32) -> (i32, i32) {
    %c0_i32 = arith.constant 0 : i32
    %c0_i32_0 = arith.constant 0 : i32
    %c0_i32_1 = arith.constant 0 : i32
    return %c0_i32, %c0_i32_0 : i32, i32
  }
  func.func @transform_4(%arg0: i32, %arg1: i32) -> (i32, i32) {
    %c0_i32 = arith.constant 0 : i32
    %c0_i32_0 = arith.constant 0 : i32
    %c0_i32_1 = arith.constant 0 : i32
    return %c0_i32, %c0_i32_0 : i32, i32
  }
  func.func @transform_5(%arg0: i32, %arg1: i32) -> (i32, i32, i32, i32) {
    %c0_i32 = arith.constant 0 : i32
    %c0_i32_0 = arith.constant 0 : i32
    %c0_i32_1 = arith.constant 0 : i32
    return %arg0, %c0_i32, %arg1, %c0_i32_0 : i32, i32, i32, i32
  }
  func.func @transform_6(%arg0: i32, %arg1: i32) -> (i32, i32, i32, i32) {
    %c0_i32 = arith.constant 0 : i32
    %c0_i32_0 = arith.constant 0 : i32
    %c0_i32_1 = arith.constant 0 : i32
    return %arg0, %c0_i32, %arg1, %c0_i32_0 : i32, i32, i32, i32
  }
  func.func @transform_7(%arg0: i32, %arg1: i32) -> (i32, i32, i32, i32) {
    %c0_i32 = arith.constant 0 : i32
    %c0_i32_0 = arith.constant 0 : i32
    %c0_i32_1 = arith.constant 0 : i32
    return %arg0, %c0_i32, %arg1, %c0_i32_0 : i32, i32, i32, i32
  }
}

module attributes {stable_mosaic.version = 11 : i64} {
  func.func @_ln_qkv_kernel(%arg0: i32, %arg1: i32, %arg2: memref<1x8x32xf32, #tpu.memory_space<vmem>>, %arg3: memref<1x32xf32, #tpu.memory_space<vmem>>, %arg4: memref<1x32xf32, #tpu.memory_space<vmem>>, %arg5: memref<32x96xf32, #tpu.memory_space<vmem>>, %arg6: memref<1x96xf32, #tpu.memory_space<vmem>>, %arg7: memref<1x4x8x8xf32, #tpu.memory_space<vmem>>, %arg8: memref<1x4x8x8xf32, #tpu.memory_space<vmem>>, %arg9: memref<1x4x8x8xf32, #tpu.memory_space<vmem>>) attributes {dimension_semantics = [#tpu.dimension_semantics<parallel>, #tpu.dimension_semantics<parallel>], iteration_bounds = array<i64: 2, 2>, scalar_prefetch = 0 : i64, scratch_operands = 0 : i64, tpu.core_type = #tpu.core_type<tc>, window_params = [{transform_indices = @transform_0, window_bounds = array<i64: 1, 8, 32>}, {pipeline_mode = #tpu.pipeline_mode<synchronous>, transform_indices = @transform_1, window_bounds = array<i64: 1, 32>}, {pipeline_mode = #tpu.pipeline_mode<synchronous>, transform_indices = @transform_2, window_bounds = array<i64: 1, 32>}, {pipeline_mode = #tpu.pipeline_mode<synchronous>, transform_indices = @transform_3, window_bounds = array<i64: 32, 96>}, {pipeline_mode = #tpu.pipeline_mode<synchronous>, transform_indices = @transform_4, window_bounds = array<i64: 1, 96>}, {transform_indices = @transform_5, window_bounds = array<i64: 1, 4, 8, 8>}, {transform_indices = @transform_6, window_bounds = array<i64: 1, 4, 8, 8>}, {transform_indices = @transform_7, window_bounds = array<i64: 1, 4, 8, 8>}]} {
    %c0 = arith.constant 0 : index
    %c0_0 = arith.constant 0 : index
    %c0_1 = arith.constant 0 : index
    %0 = vector.load %arg2[%c0, %c0_0, %c0_1] : memref<1x8x32xf32, #tpu.memory_space<vmem>>, vector<1x8x32xf32>
    %1 = vector.shape_cast %0 : vector<1x8x32xf32> to vector<8x32xf32>
    %c0_2 = arith.constant 0 : index
    %c0_3 = arith.constant 0 : index
    %2 = vector.load %arg3[%c0_2, %c0_3] : memref<1x32xf32, #tpu.memory_space<vmem>>, vector<1x32xf32>
    %3 = vector.shape_cast %2 : vector<1x32xf32> to vector<32xf32>
    %c0_4 = arith.constant 0 : index
    %c0_5 = arith.constant 0 : index
    %4 = vector.load %arg4[%c0_4, %c0_5] : memref<1x32xf32, #tpu.memory_space<vmem>>, vector<1x32xf32>
    %5 = vector.shape_cast %4 : vector<1x32xf32> to vector<32xf32>
    %cst = arith.constant dense<0.000000e+00> : vector<8xf32>
    %6 = vector.multi_reduction <add>, %1, %cst [1] : vector<8x32xf32> to vector<8xf32>
    %7 = vector.shape_cast %6 : vector<8xf32> to vector<8x1xf32>
    %cst_6 = arith.constant 3.200000e+01 : f32
    %8 = vector.broadcast %cst_6 : f32 to vector<8x1xf32>
    %9 = arith.divf %7, %8 : vector<8x1xf32>
    %10 = vector.broadcast %9 : vector<8x1xf32> to vector<8x32xf32>
    %11 = arith.subf %1, %10 : vector<8x32xf32>
    %12 = arith.mulf %11, %11 : vector<8x32xf32>
    %cst_7 = arith.constant dense<0.000000e+00> : vector<8xf32>
    %13 = vector.multi_reduction <add>, %12, %cst_7 [1] : vector<8x32xf32> to vector<8xf32>
    %14 = vector.shape_cast %13 : vector<8xf32> to vector<8x1xf32>
    %cst_8 = arith.constant 3.200000e+01 : f32
    %15 = vector.broadcast %cst_8 : f32 to vector<8x1xf32>
    %16 = arith.divf %14, %15 : vector<8x1xf32>
    %17 = vector.broadcast %9 : vector<8x1xf32> to vector<8x32xf32>
    %18 = arith.subf %1, %17 : vector<8x32xf32>
    %cst_9 = arith.constant 9.99999997E-7 : f32
    %19 = vector.broadcast %cst_9 : f32 to vector<8x1xf32>
    %20 = arith.addf %16, %19 : vector<8x1xf32>
    %21 = math.rsqrt %20 : vector<8x1xf32>
    %22 = vector.broadcast %21 : vector<8x1xf32> to vector<8x32xf32>
    %23 = arith.mulf %18, %22 : vector<8x32xf32>
    %24 = vector.shape_cast %3 : vector<32xf32> to vector<1x32xf32>
    %25 = vector.broadcast %24 : vector<1x32xf32> to vector<8x32xf32>
    %26 = arith.mulf %23, %25 : vector<8x32xf32>
    %27 = vector.shape_cast %5 : vector<32xf32> to vector<1x32xf32>
    %28 = vector.broadcast %27 : vector<1x32xf32> to vector<8x32xf32>
    %29 = arith.addf %26, %28 : vector<8x32xf32>
    %c0_10 = arith.constant 0 : index
    %c0_11 = arith.constant 0 : index
    %30 = vector.load %arg5[%c0_10, %c0_11] : memref<32x96xf32, #tpu.memory_space<vmem>>, vector<32x96xf32>
    %cst_12 = arith.constant dense<0.000000e+00> : vector<8x96xf32>
    %31 = tpu.matmul %29, %30, %cst_12 {dimension_numbers = #tpu.dot_dimension_numbers<[1], [0], [0], [1], [0, 0, 1, 1], [], []>} : vector<8x32xf32>, vector<32x96xf32>, vector<8x96xf32> -> vector<8x96xf32>
    %c0_13 = arith.constant 0 : index
    %c0_14 = arith.constant 0 : index
    %32 = vector.load %arg6[%c0_13, %c0_14] : memref<1x96xf32, #tpu.memory_space<vmem>>, vector<1x96xf32>
    %33 = vector.shape_cast %32 : vector<1x96xf32> to vector<96xf32>
    %34 = vector.shape_cast %33 : vector<96xf32> to vector<1x96xf32>
    %35 = vector.broadcast %34 : vector<1x96xf32> to vector<8x96xf32>
    %36 = arith.addf %31, %35 : vector<8x96xf32>
    %37 = vector.extract_strided_slice %36 {offsets = [0, 0], sizes = [8, 8], strides = [1, 1]} : vector<8x96xf32> to vector<8x8xf32>
    %c0_15 = arith.constant 0 : index
    %c0_16 = arith.constant 0 : index
    %c0_17 = arith.constant 0 : index
    %c0_18 = arith.constant 0 : index
    %38 = vector.load %arg7[%c0_15, %c0_16, %c0_17, %c0_18] : memref<1x4x8x8xf32, #tpu.memory_space<vmem>>, vector<1x1x8x8xf32>
    %39 = vector.shape_cast %38 : vector<1x1x8x8xf32> to vector<8x8xf32>
    %40 = vector.shape_cast %37 : vector<8x8xf32> to vector<1x1x8x8xf32>
    tpu.vector_store %arg7[%c0_15, %c0_16, %c0_17, %c0_18], %40 {strides = array<i32>} : memref<1x4x8x8xf32, #tpu.memory_space<vmem>>, vector<1x1x8x8xf32>,
    %41 = vector.extract_strided_slice %36 {offsets = [0, 32], sizes = [8, 8], strides = [1, 1]} : vector<8x96xf32> to vector<8x8xf32>
    %c0_19 = arith.constant 0 : index
    %c0_20 = arith.constant 0 : index
    %c0_21 = arith.constant 0 : index
    %c0_22 = arith.constant 0 : index
    %42 = vector.load %arg8[%c0_19, %c0_20, %c0_21, %c0_22] : memref<1x4x8x8xf32, #tpu.memory_space<vmem>>, vector<1x1x8x8xf32>
    %43 = vector.shape_cast %42 : vector<1x1x8x8xf32> to vector<8x8xf32>
    %44 = vector.shape_cast %41 : vector<8x8xf32> to vector<1x1x8x8xf32>
    tpu.vector_store %arg8[%c0_19, %c0_20, %c0_21, %c0_22], %44 {strides = array<i32>} : memref<1x4x8x8xf32, #tpu.memory_space<vmem>>, vector<1x1x8x8xf32>,
    %45 = vector.extract_strided_slice %36 {offsets = [0, 64], sizes = [8, 8], strides = [1, 1]} : vector<8x96xf32> to vector<8x8xf32>
    %c0_23 = arith.constant 0 : index
    %c0_24 = arith.constant 0 : index
    %c0_25 = arith.constant 0 : index
    %c0_26 = arith.constant 0 : index
    %46 = vector.load %arg9[%c0_23, %c0_24, %c0_25, %c0_26] : memref<1x4x8x8xf32, #tpu.memory_space<vmem>>, vector<1x1x8x8xf32>
    %47 = vector.shape_cast %46 : vector<1x1x8x8xf32> to vector<8x8xf32>
    %48 = vector.shape_cast %45 : vector<8x8xf32> to vector<1x1x8x8xf32>
    tpu.vector_store %arg9[%c0_23, %c0_24, %c0_25, %c0_26], %48 {strides = array<i32>} : memref<1x4x8x8xf32, #tpu.memory_space<vmem>>, vector<1x1x8x8xf32>,
    %49 = vector.extract_strided_slice %36 {offsets = [0, 8], sizes = [8, 8], strides = [1, 1]} : vector<8x96xf32> to vector<8x8xf32>
    %c0_27 = arith.constant 0 : index
    %c1 = arith.constant 1 : index
    %c0_28 = arith.constant 0 : index
    %c0_29 = arith.constant 0 : index
    %50 = vector.load %arg7[%c0_27, %c1, %c0_28, %c0_29] : memref<1x4x8x8xf32, #tpu.memory_space<vmem>>, vector<1x1x8x8xf32>
    %51 = vector.shape_cast %50 : vector<1x1x8x8xf32> to vector<8x8xf32>
    %52 = vector.shape_cast %49 : vector<8x8xf32> to vector<1x1x8x8xf32>
    tpu.vector_store %arg7[%c0_27, %c1, %c0_28, %c0_29], %52 {strides = array<i32>} : memref<1x4x8x8xf32, #tpu.memory_space<vmem>>, vector<1x1x8x8xf32>,
    %53 = vector.extract_strided_slice %36 {offsets = [0, 40], sizes = [8, 8], strides = [1, 1]} : vector<8x96xf32> to vector<8x8xf32>
    %c0_30 = arith.constant 0 : index
    %c1_31 = arith.constant 1 : index
    %c0_32 = arith.constant 0 : index
    %c0_33 = arith.constant 0 : index
    %54 = vector.load %arg8[%c0_30, %c1_31, %c0_32, %c0_33] : memref<1x4x8x8xf32, #tpu.memory_space<vmem>>, vector<1x1x8x8xf32>
    %55 = vector.shape_cast %54 : vector<1x1x8x8xf32> to vector<8x8xf32>
    %56 = vector.shape_cast %53 : vector<8x8xf32> to vector<1x1x8x8xf32>
    tpu.vector_store %arg8[%c0_30, %c1_31, %c0_32, %c0_33], %56 {strides = array<i32>} : memref<1x4x8x8xf32, #tpu.memory_space<vmem>>, vector<1x1x8x8xf32>,
    %57 = vector.extract_strided_slice %36 {offsets = [0, 72], sizes = [8, 8], strides = [1, 1]} : vector<8x96xf32> to vector<8x8xf32>
    %c0_34 = arith.constant 0 : index
    %c1_35 = arith.constant 1 : index
    %c0_36 = arith.constant 0 : index
    %c0_37 = arith.constant 0 : index
    %58 = vector.load %arg9[%c0_34, %c1_35, %c0_36, %c0_37] : memref<1x4x8x8xf32, #tpu.memory_space<vmem>>, vector<1x1x8x8xf32>
    %59 = vector.shape_cast %58 : vector<1x1x8x8xf32> to vector<8x8xf32>
    %60 = vector.shape_cast %57 : vector<8x8xf32> to vector<1x1x8x8xf32>
    tpu.vector_store %arg9[%c0_34, %c1_35, %c0_36, %c0_37], %60 {strides = array<i32>} : memref<1x4x8x8xf32, #tpu.memory_space<vmem>>, vector<1x1x8x8xf32>,
    %61 = vector.extract_strided_slice %36 {offsets = [0, 16], sizes = [8, 8], strides = [1, 1]} : vector<8x96xf32> to vector<8x8xf32>
    %c0_38 = arith.constant 0 : index
    %c2 = arith.constant 2 : index
    %c0_39 = arith.constant 0 : index
    %c0_40 = arith.constant 0 : index
    %62 = vector.load %arg7[%c0_38, %c2, %c0_39, %c0_40] : memref<1x4x8x8xf32, #tpu.memory_space<vmem>>, vector<1x1x8x8xf32>
    %63 = vector.shape_cast %62 : vector<1x1x8x8xf32> to vector<8x8xf32>
    %64 = vector.shape_cast %61 : vector<8x8xf32> to vector<1x1x8x8xf32>
    tpu.vector_store %arg7[%c0_38, %c2, %c0_39, %c0_40], %64 {strides = array<i32>} : memref<1x4x8x8xf32, #tpu.memory_space<vmem>>, vector<1x1x8x8xf32>,
    %65 = vector.extract_strided_slice %36 {offsets = [0, 48], sizes = [8, 8], strides = [1, 1]} : vector<8x96xf32> to vector<8x8xf32>
    %c0_41 = arith.constant 0 : index
    %c2_42 = arith.constant 2 : index
    %c0_43 = arith.constant 0 : index
    %c0_44 = arith.constant 0 : index
    %66 = vector.load %arg8[%c0_41, %c2_42, %c0_43, %c0_44] : memref<1x4x8x8xf32, #tpu.memory_space<vmem>>, vector<1x1x8x8xf32>
    %67 = vector.shape_cast %66 : vector<1x1x8x8xf32> to vector<8x8xf32>
    %68 = vector.shape_cast %65 : vector<8x8xf32> to vector<1x1x8x8xf32>
    tpu.vector_store %arg8[%c0_41, %c2_42, %c0_43, %c0_44], %68 {strides = array<i32>} : memref<1x4x8x8xf32, #tpu.memory_space<vmem>>, vector<1x1x8x8xf32>,
    %69 = vector.extract_strided_slice %36 {offsets = [0, 80], sizes = [8, 8], strides = [1, 1]} : vector<8x96xf32> to vector<8x8xf32>
    %c0_45 = arith.constant 0 : index
    %c2_46 = arith.constant 2 : index
    %c0_47 = arith.constant 0 : index
    %c0_48 = arith.constant 0 : index
    %70 = vector.load %arg9[%c0_45, %c2_46, %c0_47, %c0_48] : memref<1x4x8x8xf32, #tpu.memory_space<vmem>>, vector<1x1x8x8xf32>
    %71 = vector.shape_cast %70 : vector<1x1x8x8xf32> to vector<8x8xf32>
    %72 = vector.shape_cast %69 : vector<8x8xf32> to vector<1x1x8x8xf32>
    tpu.vector_store %arg9[%c0_45, %c2_46, %c0_47, %c0_48], %72 {strides = array<i32>} : memref<1x4x8x8xf32, #tpu.memory_space<vmem>>, vector<1x1x8x8xf32>,
    %73 = vector.extract_strided_slice %36 {offsets = [0, 24], sizes = [8, 8], strides = [1, 1]} : vector<8x96xf32> to vector<8x8xf32>
    %c0_49 = arith.constant 0 : index
    %c3 = arith.constant 3 : index
    %c0_50 = arith.constant 0 : index
    %c0_51 = arith.constant 0 : index
    %74 = vector.load %arg7[%c0_49, %c3, %c0_50, %c0_51] : memref<1x4x8x8xf32, #tpu.memory_space<vmem>>, vector<1x1x8x8xf32>
    %75 = vector.shape_cast %74 : vector<1x1x8x8xf32> to vector<8x8xf32>
    %76 = vector.shape_cast %73 : vector<8x8xf32> to vector<1x1x8x8xf32>
    tpu.vector_store %arg7[%c0_49, %c3, %c0_50, %c0_51], %76 {strides = array<i32>} : memref<1x4x8x8xf32, #tpu.memory_space<vmem>>, vector<1x1x8x8xf32>,
    %77 = vector.extract_strided_slice %36 {offsets = [0, 56], sizes = [8, 8], strides = [1, 1]} : vector<8x96xf32> to vector<8x8xf32>
    %c0_52 = arith.constant 0 : index
    %c3_53 = arith.constant 3 : index
    %c0_54 = arith.constant 0 : index
    %c0_55 = arith.constant 0 : index
    %78 = vector.load %arg8[%c0_52, %c3_53, %c0_54, %c0_55] : memref<1x4x8x8xf32, #tpu.memory_space<vmem>>, vector<1x1x8x8xf32>
    %79 = vector.shape_cast %78 : vector<1x1x8x8xf32> to vector<8x8xf32>
    %80 = vector.shape_cast %77 : vector<8x8xf32> to vector<1x1x8x8xf32>
    tpu.vector_store %arg8[%c0_52, %c3_53, %c0_54, %c0_55], %80 {strides = array<i32>} : memref<1x4x8x8xf32, #tpu.memory_space<vmem>>, vector<1x1x8x8xf32>,
    %81 = vector.extract_strided_slice %36 {offsets = [0, 88], sizes = [8, 8], strides = [1, 1]} : vector<8x96xf32> to vector<8x8xf32>
    %c0_56 = arith.constant 0 : index
    %c3_57 = arith.constant 3 : index
    %c0_58 = arith.constant 0 : index
    %c0_59 = arith.constant 0 : index
    %82 = vector.load %arg9[%c0_56, %c3_57, %c0_58, %c0_59] : memref<1x4x8x8xf32, #tpu.memory_space<vmem>>, vector<1x1x8x8xf32>
    %83 = vector.shape_cast %82 : vector<1x1x8x8xf32> to vector<8x8xf32>
    %84 = vector.shape_cast %81 : vector<8x8xf32> to vector<1x1x8x8xf32>
    tpu.vector_store %arg9[%c0_56, %c3_57, %c0_58, %c0_59], %84 {strides = array<i32>} : memref<1x4x8x8xf32, #tpu.memory_space<vmem>>, vector<1x1x8x8xf32>,
    return
  }
  func.func @transform_0(%arg0: i32, %arg1: i32) -> (i32, i32, i32) {
    %c0_i32 = arith.constant 0 : i32
    %c0_i32_0 = arith.constant 0 : i32
    return %arg0, %arg1, %c0_i32 : i32, i32, i32
  }
  func.func @transform_1(%arg0: i32, %arg1: i32) -> (i32, i32) {
    %c0_i32 = arith.constant 0 : i32
    %c0_i32_0 = arith.constant 0 : i32
    %c0_i32_1 = arith.constant 0 : i32
    return %c0_i32, %c0_i32_0 : i32, i32
  }
  func.func @transform_2(%arg0: i32, %arg1: i32) -> (i32, i32) {
    %c0_i32 = arith.constant 0 : i32
    %c0_i32_0 = arith.constant 0 : i32
    %c0_i32_1 = arith.constant 0 : i32
    return %c0_i32, %c0_i32_0 : i32, i32
  }
  func.func @transform_3(%arg0: i32, %arg1: i32) -> (i32, i32) {
    %c0_i32 = arith.constant 0 : i32
    %c0_i32_0 = arith.constant 0 : i32
    %c0_i32_1 = arith.constant 0 : i32
    return %c0_i32, %c0_i32_0 : i32, i32
  }
  func.func @transform_4(%arg0: i32, %arg1: i32) -> (i32, i32) {
    %c0_i32 = arith.constant 0 : i32
    %c0_i32_0 = arith.constant 0 : i32
    %c0_i32_1 = arith.constant 0 : i32
    return %c0_i32, %c0_i32_0 : i32, i32
  }
  func.func @transform_5(%arg0: i32, %arg1: i32) -> (i32, i32, i32, i32) {
    %c0_i32 = arith.constant 0 : i32
    %c0_i32_0 = arith.constant 0 : i32
    %c0_i32_1 = arith.constant 0 : i32
    return %arg0, %c0_i32, %arg1, %c0_i32_0 : i32, i32, i32, i32
  }
  func.func @transform_6(%arg0: i32, %arg1: i32) -> (i32, i32, i32, i32) {
    %c0_i32 = arith.constant 0 : i32
    %c0_i32_0 = arith.constant 0 : i32
    %c0_i32_1 = arith.constant 0 : i32
    return %arg0, %c0_i32, %arg1, %c0_i32_0 : i32, i32, i32, i32
  }
  func.func @transform_7(%arg0: i32, %arg1: i32) -> (i32, i32, i32, i32) {
    %c0_i32 = arith.constant 0 : i32
    %c0_i32_0 = arith.constant 0 : i32
    %c0_i32_1 = arith.constant 0 : i32
    return %arg0, %c0_i32, %arg1, %c0_i32_0 : i32, i32, i32, i32
  }
}

</mosaic_0001>

<llo_original>
// kernel: tpu_custom_call.1
$region0: #{tpu_custom_call.1}
  #allocation0 [shape = 'u32[]', space=smem, size = 0x4, offset = 0x4, fixed_abs, tag = 'smem constant byte address 0x4 - core index']
  #allocation1 [shape = 'u32[144,128]{1,0:T(1,128)}', space=vmem, size = 0x12000, scoped, tag = 'internal scratch']
  %s0 = inlined_call_operand.hbm [shape: f32[2,16,32], index: 0, kind: input, shape index: {}]
  %s1 = inlined_call_operand.hbm [shape: f32[1,32], index: 1, kind: input, shape index: {}]
  %s2 = inlined_call_operand.hbm [shape: f32[1,32], index: 2, kind: input, shape index: {}]
  %s3 = inlined_call_operand.hbm [shape: f32[32,96], index: 3, kind: input, shape index: {}]
  %s4 = inlined_call_operand.hbm [shape: f32[1,96], index: 4, kind: input, shape index: {}]
  %s5 = inlined_call_operand.hbm [shape: f32[2,4,16,8], index: 5, kind: output, shape index: {0}]
  %s6 = inlined_call_operand.hbm [shape: f32[2,4,16,8], index: 6, kind: output, shape index: {1}]
  %s7 = inlined_call_operand.hbm [shape: f32[2,4,16,8], index: 7, kind: output, shape index: {2}]
  %8 = xla_tuple %s5, %s6, %s7
  %s9 = sld [smem:[#allocation0]]
  $region89: #{tpu_custom_call.1} parent=0
    _
  %s11 = ssub.s32 1, %s9
  %s12 = scalar_select 0, %s11, %s9
  $region1: #{tpu_custom_call.1} parent=0
    #allocation2 [shape = 'u8[8192]{0}', space=vmem, size = 0x2000, scoped, tag = 'input window, operand 0']
    #allocation3 [shape = 's32[2]{0}', space=sflag, size = 0x8, scoped, tag = 'scoped memory for tpu_custom_call.1']
    #allocation4 [shape = 's32[2]{0}', space=sflag, size = 0x8, scoped, tag = 'scoped memory for tpu_custom_call.1']
    #allocation5 [shape = 'u8[512]{0}', space=vmem, size = 0x400, scoped, tag = 'input window, operand 1, single buffered']
    #allocation6 [shape = 's32[1]{0}', space=sflag, size = 0x4, scoped, tag = 'scoped memory for tpu_custom_call.1']
    #allocation7 [shape = 'u8[512]{0}', space=vmem, size = 0x400, scoped, tag = 'input window, operand 2, single buffered']
    #allocation8 [shape = 'u8[16384]{0}', space=vmem, size = 0x4000, scoped, tag = 'input window, operand 3, single buffered']
    #allocation9 [shape = 's32[1]{0}', space=sflag, size = 0x4, scoped, tag = 'scoped memory for tpu_custom_call.1']
    #allocation10 [shape = 'u8[512]{0}', space=vmem, size = 0x400, scoped, tag = 'input window, operand 4, single buffered']
    #allocation11 [shape = 'u8[32768]{0}', space=vmem, size = 0x8000, scoped, tag = 'output window, operand 0']
    #allocation12 [shape = 'u8[32768]{0}', space=vmem, size = 0x8000, scoped, tag = 'output window, operand 1']
    #allocation13 [shape = 's32[2]{0}', space=sflag, size = 0x8, scoped, tag = 'scoped memory for tpu_custom_call.1']
    #allocation14 [shape = 'u8[32768]{0}', space=vmem, size = 0x8000, scoped, tag = 'output window, operand 2']
    %13 = vsyncpa [#allocation3], 0
    %s14 = scalar_lea.sflag [#allocation3], 1
    %15 = vsyncpa %s14, 0
    %16 = vsyncpa [#allocation6], 0
    %17 = vsyncpa [#allocation9], 0
    %18 = vsyncpa [#allocation4], 0
    %s19 = scalar_lea.sflag [#allocation4], 1
    %20 = vsyncpa %s19, 0
    %21 = vsyncpa [#allocation13], 0
    %s22 = scalar_lea.sflag [#allocation13], 1
    %23 = vsyncpa %s22, 0
    loop: start=0, step=1, limit=6
    $region2: #{tpu_custom_call.1} parent=1 // loop_pre_header
      _
    $region3: #{tpu_custom_call.1} parent=1 // loop_header
      %s25 = sphi 0, %s29
      %p26 = scmp.ge.s32.totalorder %s25, 6
      %s32 = sphi 0, %s44
      %s33 = sphi 0, %s40
      %s34 = sphi 0, %s32
      %s35 = sphi 0, %s33
      %s36 = sphi 0, %s34
      %s37 = sphi 0, %s35
      %s49 = sphi 0, %s51
      %s52 = sphi 0, %s49
      %s53 = sphi 0, %s52
      %s69 = sphi 0, %s53
      %s73 = sphi 0, %s73
      %s75 = sphi 0, %s73
      %s76 = sphi 0, %s75
      %s90 = sphi 0, %s76
      %s94 = sphi 0, %s94
      %s96 = sphi 0, %s94
      %s97 = sphi 0, %s96
      %s111 = sphi 0, %s97
      %s115 = sphi 0, %s115
      %s117 = sphi 0, %s115
      %s118 = sphi 0, %s117
      %s132 = sphi 0, %s118
      %s136 = sphi 0, %s136
      %s138 = sphi 0, %s136
      %s139 = sphi 0, %s138
      %s153 = sphi 0, %s139
      %s161 = sphi 0, %s163
      %s164 = sphi 0, %s161
      %s165 = sphi 0, %s164
      %s181 = sphi 0, %s165
      %s189 = sphi 0, %s191
      %s192 = sphi 0, %s189
      %s193 = sphi 0, %s192
      %s209 = sphi 0, %s193
      %s217 = sphi 0, %s219
      %s220 = sphi 0, %s217
      %s221 = sphi 0, %s220
      %s237 = sphi 0, %s221
    $region4: #{tpu_custom_call.1} parent=1 // loop_header_branch
      %28 = sbr.rel (%p26) target = $region8
    $region5: #{tpu_custom_call.1} parent=1 // loop_body
      %s30 = ssub.s32 %s25, 1
      %s31 = ssub.s32 %s25, 2
      %s38 = sadd.s32 1, %s33
      %p39 = scmp.ge.s32.totalorder %s38, 2
      %s40 = scalar_select %p39, 0, %s38
      %s41 = sadd.s32 1, %s32
      %s42 = scalar_select %p39, %s41, %s32
      %p43 = scmp.ge.s32.totalorder %s42, 2
      %s44 = scalar_select %p43, 0, %s42
      %s45 = ssub.s32 %s32, %s44
      %s46 = ssub.s32 %s33, %s40
      %s47 = sor.u32 %s45, %s46
      %p48 = scmp.eq.s32.totalorder %s47, 0
      %s50 = sadd.s32 %s49, 1
      %s51 = scalar_select %p48, %s49, %s50
      %p54 = pneg %p48
      %p55 = scmp.eq.s32.totalorder %s25, 3
      %p56 = por %p54, %p55
      %p57 = scmp.ne.s32.totalorder %s49, %s52
      %p58 = scmp.eq.s32.totalorder %s25, 0
      %p59 = por %p57, %p58
      %p60 = scmp.ne.s32.totalorder %s49, %s52
      %p61 = scmp.eq.s32.totalorder %s30, 3
      %p62 = por %p60, %p61
      %p63 = scmp.ne.s32.totalorder %s52, %s53
      %p64 = scmp.eq.s32.totalorder %s30, 0
      %p65 = por %p63, %p64
      %p66 = scmp.ne.s32.totalorder %s52, %s53
      %p67 = scmp.eq.s32.totalorder %s31, 3
      %p68 = por %p66, %p67
      %p70 = scmp.ne.s32.totalorder %s53, %s69
      %p71 = scmp.eq.s32.totalorder %s31, 0
      %p72 = por %p70, %p71
      %s74 = sadd.s32 %s73, 1
      %p77 = scmp.eq.s32.totalorder %s25, 3
      %p78 = scmp.ne.s32.totalorder %s73, %s75
      %p79 = scmp.eq.s32.totalorder %s25, 0
      %p80 = por %p78, %p79
      %p81 = scmp.ne.s32.totalorder %s73, %s75
      %p82 = scmp.eq.s32.totalorder %s30, 3
      %p83 = por %p81, %p82
      %p84 = scmp.ne.s32.totalorder %s75, %s76
      %p85 = scmp.eq.s32.totalorder %s30, 0
      %p86 = por %p84, %p85
      %p87 = scmp.ne.s32.totalorder %s75, %s76
      %p88 = scmp.eq.s32.totalorder %s31, 3
      %p89 = por %p87, %p88
      %p91 = scmp.ne.s32.totalorder %s76, %s90
      %p92 = scmp.eq.s32.totalorder %s31, 0
      %p93 = por %p91, %p92
      %s95 = sadd.s32 %s94, 1
      %p98 = scmp.eq.s32.totalorder %s25, 3
      %p99 = scmp.ne.s32.totalorder %s94, %s96
      %p100 = scmp.eq.s32.totalorder %s25, 0
      %p101 = por %p99, %p100
      %p102 = scmp.ne.s32.totalorder %s94, %s96
      %p103 = scmp.eq.s32.totalorder %s30, 3
      %p104 = por %p102, %p103
      %p105 = scmp.ne.s32.totalorder %s96, %s97
      %p106 = scmp.eq.s32.totalorder %s30, 0
      %p107 = por %p105, %p106
      %p108 = scmp.ne.s32.totalorder %s96, %s97
      %p109 = scmp.eq.s32.totalorder %s31, 3
      %p110 = por %p108, %p109
      %p112 = scmp.ne.s32.totalorder %s97, %s111
      %p113 = scmp.eq.s32.totalorder %s31, 0
      %p114 = por %p112, %p113
      %s116 = sadd.s32 %s115, 1
      %p119 = scmp.eq.s32.totalorder %s25, 3
      %p120 = scmp.ne.s32.totalorder %s115, %s117
      %p121 = scmp.eq.s32.totalorder %s25, 0
      %p122 = por %p120, %p121
      %p123 = scmp.ne.s32.totalorder %s115, %s117
      %p124 = scmp.eq.s32.totalorder %s30, 3
      %p125 = por %p123, %p124
      %p126 = scmp.ne.s32.totalorder %s117, %s118
      %p127 = scmp.eq.s32.totalorder %s30, 0
      %p128 = por %p126, %p127
      %p129 = scmp.ne.s32.totalorder %s117, %s118
      %p130 = scmp.eq.s32.totalorder %s31, 3
      %p131 = por %p129, %p130
      %p133 = scmp.ne.s32.totalorder %s118, %s132
      %p134 = scmp.eq.s32.totalorder %s31, 0
      %p135 = por %p133, %p134
      %s137 = sadd.s32 %s136, 1
      %p140 = scmp.eq.s32.totalorder %s25, 3
      %p141 = scmp.ne.s32.totalorder %s136, %s138
      %p142 = scmp.eq.s32.totalorder %s25, 0
      %p143 = por %p141, %p142
      %p144 = scmp.ne.s32.totalorder %s136, %s138
      %p145 = scmp.eq.s32.totalorder %s30, 3
      %p146 = por %p144, %p145
      %p147 = scmp.ne.s32.totalorder %s138, %s139
      %p148 = scmp.eq.s32.totalorder %s30, 0
      %p149 = por %p147, %p148
      %p150 = scmp.ne.s32.totalorder %s138, %s139
      %p151 = scmp.eq.s32.totalorder %s31, 3
      %p152 = por %p150, %p151
      %p154 = scmp.ne.s32.totalorder %s139, %s153
      %p155 = scmp.eq.s32.totalorder %s31, 0
      %p156 = por %p154, %p155
      %s157 = ssub.s32 %s32, %s44
      %s158 = ssub.s32 %s33, %s40
      %s159 = sor.u32 %s157, %s158
      %p160 = scmp.eq.s32.totalorder %s159, 0
      %s162 = sadd.s32 %s161, 1
      %s163 = scalar_select %p160, %s161, %s162
      %p166 = pneg %p160
      %p167 = scmp.eq.s32.totalorder %s25, 3
      %p168 = por %p166, %p167
      %p169 = scmp.ne.s32.totalorder %s161, %s164
      %p170 = scmp.eq.s32.totalorder %s25, 0
      %p171 = por %p169, %p170
      %p172 = scmp.ne.s32.totalorder %s161, %s164
      %p173 = scmp.eq.s32.totalorder %s30, 3
      %p174 = por %p172, %p173
      %p175 = scmp.ne.s32.totalorder %s164, %s165
      %p176 = scmp.eq.s32.totalorder %s30, 0
      %p177 = por %p175, %p176
      %p178 = scmp.ne.s32.totalorder %s164, %s165
      %p179 = scmp.eq.s32.totalorder %s31, 3
      %p180 = por %p178, %p179
      %p182 = scmp.ne.s32.totalorder %s165, %s181
      %p183 = scmp.eq.s32.totalorder %s31, 0
      %p184 = por %p182, %p183
      %s185 = ssub.s32 %s32, %s44
      %s186 = ssub.s32 %s33, %s40
      %s187 = sor.u32 %s185, %s186
      %p188 = scmp.eq.s32.totalorder %s187, 0
      %s190 = sadd.s32 %s189, 1
      %s191 = scalar_select %p188, %s189, %s190
      %p194 = pneg %p188
      %p195 = scmp.eq.s32.totalorder %s25, 3
      %p196 = por %p194, %p195
      %p197 = scmp.ne.s32.totalorder %s189, %s192
      %p198 = scmp.eq.s32.totalorder %s25, 0
      %p199 = por %p197, %p198
      %p200 = scmp.ne.s32.totalorder %s189, %s192
      %p201 = scmp.eq.s32.totalorder %s30, 3
      %p202 = por %p200, %p201
      %p203 = scmp.ne.s32.totalorder %s192, %s193
      %p204 = scmp.eq.s32.totalorder %s30, 0
      %p205 = por %p203, %p204
      %p206 = scmp.ne.s32.totalorder %s192, %s193
      %p207 = scmp.eq.s32.totalorder %s31, 3
      %p208 = por %p206, %p207
      %p210 = scmp.ne.s32.totalorder %s193, %s209
      %p211 = scmp.eq.s32.totalorder %s31, 0
      %p212 = por %p210, %p211
      %s213 = ssub.s32 %s32, %s44
      %s214 = ssub.s32 %s33, %s40
      %s215 = sor.u32 %s213, %s214
      %p216 = scmp.eq.s32.totalorder %s215, 0
      %s218 = sadd.s32 %s217, 1
      %s219 = scalar_select %p216, %s217, %s218
      %p222 = pneg %p216
      %p223 = scmp.eq.s32.totalorder %s25, 3
      %p224 = por %p222, %p223
      %p225 = scmp.ne.s32.totalorder %s217, %s220
      %p226 = scmp.eq.s32.totalorder %s25, 0
      %p227 = por %p225, %p226
      %p228 = scmp.ne.s32.totalorder %s217, %s220
      %p229 = scmp.eq.s32.totalorder %s30, 3
      %p230 = por %p228, %p229
      %p231 = scmp.ne.s32.totalorder %s220, %s221
      %p232 = scmp.eq.s32.totalorder %s30, 0
      %p233 = por %p231, %p232
      %p234 = scmp.ne.s32.totalorder %s220, %s221
      %p235 = scmp.eq.s32.totalorder %s31, 3
      %p236 = por %p234, %p235
      %p238 = scmp.ne.s32.totalorder %s221, %s237
      %p239 = scmp.eq.s32.totalorder %s31, 0
      %p240 = por %p238, %p239
      %p241 = scmp.le.s32.totalorder 1, %s25
      %p242 = scmp.lt.s32.totalorder %s25, 5
      %p243 = pnand %p241, %p242
      %p244 = pneg %p243
      // Predicated region
      $region9: #{tpu_custom_call.1} parent=5 // pred_check
        _
      $region10: #{tpu_custom_call.1} parent=5 // pred_check_branch
        %246 = sbr.rel (%p243) target = $region12
      $region11: #{tpu_custom_call.1} parent=5 // pred_region
        %s247 = ssub.s32 %s25, 1
        // Predicated region
        $region13: #{tpu_custom_call.1} parent=11 // pred_check
          %p248 = pneg %p86
        $region14: #{tpu_custom_call.1} parent=11 // pred_check_branch
          %250 = sbr.rel (%p248) target = $region16
        $region15: #{tpu_custom_call.1} parent=11 // pred_region
          %s252 = ssub.s32 16, 16
          %253 = vsyncadd [#allocation6], %s252
          %s255 = sshll.u32 [#allocation5], 4
          %s256 = int_to_ptr.vmem [resolvable:$true] %s255
          %258 = dma.hbm_to_vmem [thread:$0]  %s1, 16, %s256, [#allocation6]
        $region16: #{tpu_custom_call.1} parent=11 // pred_fallthru
          _
        // Predicated region
        $region17: #{tpu_custom_call.1} parent=11 // pred_check
          %p259 = pneg %p107
        $region18: #{tpu_custom_call.1} parent=11 // pred_check_branch
          %261 = sbr.rel (%p259) target = $region20
        $region19: #{tpu_custom_call.1} parent=11 // pred_region
          %s263 = ssub.s32 16, 16
          %264 = vsyncadd [#allocation6], %s263
          %s266 = sshll.u32 [#allocation7], 4
          %s267 = int_to_ptr.vmem [resolvable:$true] %s266
          %269 = dma.hbm_to_vmem [thread:$0]  %s2, 16, %s267, [#allocation6]
        $region20: #{tpu_custom_call.1} parent=11 // pred_fallthru
          _
        // Predicated region
        $region21: #{tpu_custom_call.1} parent=11 // pred_check
          %p270 = pneg %p128
        $region22: #{tpu_custom_call.1} parent=11 // pred_check_branch
          %272 = sbr.rel (%p270) target = $region24
        $region23: #{tpu_custom_call.1} parent=11 // pred_region
          %s274 = ssub.s32 512, 512
          %275 = vsyncadd [#allocation9], %s274
          %s276 = sshll.u32 [#allocation8], 4
          %s277 = int_to_ptr.vmem [resolvable:$true] %s276
          %282 = dma.hbm_to_vmem [thread:$0]  %s3, 512, %s277, [#allocation9], 128, 128, 8
        $region24: #{tpu_custom_call.1} parent=11 // pred_fallthru
          _
        // Predicated region
        $region25: #{tpu_custom_call.1} parent=11 // pred_check
          %p283 = pneg %p149
        $region26: #{tpu_custom_call.1} parent=11 // pred_check_branch
          %285 = sbr.rel (%p283) target = $region28
        $region27: #{tpu_custom_call.1} parent=11 // pred_region
          %s287 = ssub.s32 16, 16
          %288 = vsyncadd [#allocation9], %s287
          %s290 = sshll.u32 [#allocation10], 4
          %s291 = int_to_ptr.vmem [resolvable:$true] %s290
          %293 = dma.hbm_to_vmem [thread:$0]  %s4, 16, %s291, [#allocation9]
        $region28: #{tpu_custom_call.1} parent=11 // pred_fallthru
          _
      $region12: #{tpu_custom_call.1} parent=5 // pred_fallthru
        _
      %p294 = scmp.lt.s32.totalorder %s25, 4
      // Predicated region
      $region29: #{tpu_custom_call.1} parent=5 // pred_check
        %p295 = pneg %p294
      $region30: #{tpu_custom_call.1} parent=5 // pred_check_branch
        %297 = sbr.rel (%p295) target = $region32
      $region31: #{tpu_custom_call.1} parent=5 // pred_region
        // Predicated region
        $region33: #{tpu_custom_call.1} parent=31 // pred_check
          %p298 = pneg %p59
        $region34: #{tpu_custom_call.1} parent=31 // pred_check_branch
          %300 = sbr.rel (%p298) target = $region36
        $region35: #{tpu_custom_call.1} parent=31 // pred_region
          %s301 = sand.u32 %s49, 1
          %s302 = scalar_lea.sflag [#allocation3], %s301
          %s303 = sand.u32 %s49, 1
          %s304 = smul.addr %s303, 8
          %s305 = scalar_lea.vmem [#allocation2], %s304
          %s307 = ssub.s32 128, 128
          %308 = vsyncadd %s302, %s307
          %s309 = smul.addr %s32, 2
          %s310 = sadd.s32 %s33, %s309
          %s311 = smul.addr %s310, 128
          %s312 = scalar_lea.hbm %s0, %s311
          %s314 = sshll.u32 %s305, 4
          %s315 = int_to_ptr.vmem [resolvable:$true] %s314
          %317 = dma.hbm_to_vmem [thread:$0]  %s312, 128, %s315, %s302
        $region36: #{tpu_custom_call.1} parent=31 // pred_fallthru
          _
      $region32: #{tpu_custom_call.1} parent=5 // pred_fallthru
        _
      %p318 = scmp.le.s32.totalorder 1, %s25
      %p319 = scmp.lt.s32.totalorder %s25, 5
      %p320 = pnand %p318, %p319
      %p321 = pneg %p320
      // Predicated region
      $region37: #{tpu_custom_call.1} parent=5 // pred_check
        _
      $region38: #{tpu_custom_call.1} parent=5 // pred_check_branch
        %323 = sbr.rel (%p320) target = $region40
      $region39: #{tpu_custom_call.1} parent=5 // pred_region
        %s324 = ssub.s32 %s25, 1
        %s325 = sand.u32 %s52, 1
        %s326 = scalar_lea.sflag [#allocation3], %s325
        %s327 = sand.u32 %s52, 1
        %s328 = smul.addr %s327, 8
        %s329 = scalar_lea.vmem [#allocation2], %s328
        // Predicated region
        $region41: #{tpu_custom_call.1} parent=39 // pred_check
          %p330 = pneg %p65
        $region42: #{tpu_custom_call.1} parent=39 // pred_check_branch
          %332 = sbr.rel (%p330) target = $region44
        $region43: #{tpu_custom_call.1} parent=39 // pred_region
          %333 = dma.done %s326, 128
        $region44: #{tpu_custom_call.1} parent=39 // pred_fallthru
          _
        // Predicated region
        $region45: #{tpu_custom_call.1} parent=39 // pred_check
          %p334 = pneg %p86
        $region46: #{tpu_custom_call.1} parent=39 // pred_check_branch
          %336 = sbr.rel (%p334) target = $region48
        $region47: #{tpu_custom_call.1} parent=39 // pred_region
          %337 = dma.done [#allocation6], 16
        $region48: #{tpu_custom_call.1} parent=39 // pred_fallthru
          _
        // Predicated region
        $region49: #{tpu_custom_call.1} parent=39 // pred_check
          %p338 = pneg %p107
        $region50: #{tpu_custom_call.1} parent=39 // pred_check_branch
          %340 = sbr.rel (%p338) target = $region52
        $region51: #{tpu_custom_call.1} parent=39 // pred_region
          %341 = dma.done [#allocation6], 16
        $region52: #{tpu_custom_call.1} parent=39 // pred_fallthru
          _
        // Predicated region
        $region53: #{tpu_custom_call.1} parent=39 // pred_check
          %p342 = pneg %p128
        $region54: #{tpu_custom_call.1} parent=39 // pred_check_branch
          %344 = sbr.rel (%p342) target = $region56
        $region55: #{tpu_custom_call.1} parent=39 // pred_region
          %345 = dma.done [#allocation9], 512
        $region56: #{tpu_custom_call.1} parent=39 // pred_fallthru
          _
        // Predicated region
        $region57: #{tpu_custom_call.1} parent=39 // pred_check
          %p346 = pneg %p149
        $region58: #{tpu_custom_call.1} parent=39 // pred_check_branch
          %348 = sbr.rel (%p346) target = $region60
        $region59: #{tpu_custom_call.1} parent=39 // pred_region
          %349 = dma.done [#allocation9], 16
        $region60: #{tpu_custom_call.1} parent=39 // pred_fallthru
          _
        %s350 = sand.u32 %s52, 1
        %s351 = scalar_lea.sflag [#allocation3], %s350
        %s352 = sand.u32 %s52, 1
        %s353 = smul.addr %s352, 8
        %s354 = scalar_lea.vmem [#allocation2], %s353
        %p355 = pneg %p65
        %p356 = pneg %p62
        %p357 = pneg %p86
        %p358 = pneg %p83
        %p359 = pneg %p107
        %p360 = pneg %p104
        %p361 = pneg %p128
        %p362 = pneg %p125
        %p363 = pneg %p149
        %p364 = pneg %p146
        %p365 = pneg %p177
        %p366 = pneg %p174
        %s367 = sand.u32 %s164, 1
        %s368 = scalar_lea.sflag [#allocation4], %s367
        %s369 = sand.u32 %s164, 1
        %s370 = smul.addr %s369, 32
        %s371 = scalar_lea.vmem [#allocation11], %s370
        %p372 = pneg %p205
        %p373 = pneg %p202
        %s374 = sand.u32 %s30, 1
        %s375 = scalar_lea.sflag [#allocation13], %s374
        %s376 = sand.u32 %s192, 1
        %s377 = smul.addr %s376, 32
        %s378 = scalar_lea.vmem [#allocation12], %s377
        %p379 = pneg %p233
        %p380 = pneg %p230
        %s381 = sand.u32 %s30, 1
        %s382 = scalar_lea.sflag [#allocation13], %s381
        %s383 = sand.u32 %s220, 1
        %s384 = smul.addr %s383, 32
        %s385 = scalar_lea.vmem [#allocation14], %s384
        %v386 = vld [vmem:[%s329] sm:$0xff]
        %v387 = vld [vmem:[#allocation5] sm:$0x1]
        %v388 = vld [vmem:[#allocation7] sm:$0x1]
        %vm389 = vcmask 261120
        %v390 = vsel %vm389, %v386, 0.0
        %391 = vadd.xlane.f32.xlu0 %v390
        %v392 = vpop.xlane.xlu0 %391
        %v393 = vrcp.pop 32.0
        %v394 = vmul.f32 %v392, %v393
        %v395 = vsub.f32 %v386, %v394
        %v396 = vmul.f32 %v395, %v395
        %v397 = vsel %vm389, %v396, 0.0
        %398 = vadd.xlane.f32.xlu0 %v397
        %v399 = vpop.xlane.xlu0 %398
        %v400 = vmul.f32 %v399, %v393
        %v401 = vadd.f32 %v400, 1e-06
        %v402 = vrsqrt.pop %v401
        %v403 = vmul.f32 %v395, %v402
        %v405 = vlaneseq
        %v406 = vshrl.u32 %v405, 7
        %v407 = vsub.s32 0, %v406
        %v408 = vrot.slane %v387, %v407
        %v410 = vmul.f32 %v403, %v408
        %v412 = vlaneseq
        %v413 = vshrl.u32 %v412, 7
        %v414 = vsub.s32 0, %v413
        %v415 = vrot.slane %v388, %v414
        %v417 = vadd.f32 %v410, %v415
        %v418 = vld [vmem:[#allocation8] sm:$0xff]
        %v419 = vld [vmem:[#allocation8 + $0x8] sm:$0xff]
        %v420 = vld [vmem:[#allocation8 + $0x10] sm:$0xff]
        %v421 = vld [vmem:[#allocation8 + $0x18] sm:$0xff]
        %v422 = vld [vmem:[#allocation10] sm:$0x1]
        %v424 = vlaneseq
        %v425 = vshrl.u32 %v424, 7
        %v426 = vsub.s32 0, %v425
        %v427 = vrot.slane %v422, %v426
        %v430 = vsel %vm389, %v417, 0
        %432 = vmatprep.subr.mxu0 0.0
        %433 = vmatpush1.msra.mxu0 %v418
        %434 = vmatprep.subr.mxu0 0.0
        %435 = vmatpush1.msra.mxu0 %v419
        %436 = vmatprep.subr.mxu0 0.0
        %437 = vmatpush1.msra.mxu0 %v420
        %438 = vmatprep.subr.mxu0 0.0
        %439 = vmatpush1.msra.mxu0 %v421
        %440 = vmatprep.subr.mxu0 0.0
        %441 = vmatpush1.msra.mxu0 0.0
        %442 = vmatprep.subr.mxu0 0.0
        %443 = vmatpush1.msra.mxu0 0.0
        %444 = vmatprep.subr.mxu0 0.0
        %445 = vmatpush1.msra.mxu0 0.0
        %446 = vmatprep.subr.mxu0 0.0
        %447 = vmatpush1.msra.mxu0 0.0
        %448 = vmatprep.subr.mxu0 0.0
        %449 = vmatpush1.msra.mxu0 0.0
        %450 = vmatprep.subr.mxu0 0.0
        %451 = vmatpush1.msra.mxu0 0.0
        %452 = vmatprep.subr.mxu0 0.0
        %453 = vmatpush1.msra.mxu0 0.0
        %454 = vmatprep.subr.mxu0 0.0
        %455 = vmatpush1.msra.mxu0 0.0
        %456 = vmatprep.subr.mxu0 0.0
        %457 = vmatpush1.msra.mxu0 0.0
        %458 = vmatprep.subr.mxu0 0.0
        %459 = vmatpush1.msra.mxu0 0.0
        %460 = vmatprep.subr.mxu0 0.0
        %461 = vmatpush1.msra.mxu0 0.0
        %462 = vmatprep.subr.mxu0 0.0
        %463 = vmatpush1.msra.mxu0 0.0
        %464 = vmatprep.subr.mxu0 0.0
        %465 = vmatpush1.msra.mxu0 0.0
        %466 = vmatprep.subr.mxu0 0.0
        %467 = vmatpush1.msra.mxu0 0.0
        %468 = vmatprep.subr.mxu0 0.0
        %469 = vmatpush1.msra.mxu0 0.0
        %470 = vmatprep.subr.mxu0 0.0
        %471 = vmatpush1.msra.mxu0 0.0
        %472 = vmatprep.subr.mxu0 0.0
        %473 = vmatpush1.msra.mxu0 0.0
        %474 = vmatprep.subr.mxu0 0.0
        %475 = vmatpush1.msra.mxu0 0.0
        %476 = vmatprep.subr.mxu0 0.0
        %477 = vmatpush1.msra.mxu0 0.0
        %478 = vmatprep.subr.mxu0 0.0
        %479 = vmatpush1.msra.mxu0 0.0
        %480 = vmatprep.subr.mxu0 0.0
        %481 = vmatpush1.msra.mxu0 0.0
        %482 = vmatprep.subr.mxu0 0.0
        %483 = vmatpush1.msra.mxu0 0.0
        %484 = vmatprep.subr.mxu0 0.0
        %485 = vmatpush1.msra.mxu0 0.0
        %486 = vmatprep.subr.mxu0 0.0
        %487 = vmatpush1.msra.mxu0 0.0
        %488 = vmatprep.subr.mxu0 0.0
        %489 = vmatpush1.msra.mxu0 0.0
        %490 = vmatprep.subr.mxu0 0.0
        %491 = vmatpush1.msra.mxu0 0.0
        %492 = vmatprep.subr.mxu0 0.0
        %493 = vmatpush1.msra.mxu0 0.0
        %494 = vmatprep.subr.mxu0 0.0
        %495 = vmatpush1.msra.mxu0 0.0
        %496 = vmatprep.mubr.f32.mxu0 0.0
        %497 = vmatmul.mubr.f32.gmra.mrb[0].mxu0 %v430
        %v498 = vpop.f32.mrb[0].mxu0
        %v499 = vadd.f32 %v427, %v498
        %v500 = vpop.f32.mrb[0].mxu0
        %501 = vdwg.mxu0
        %vm502 = vcmask 64512
        %503 = vst.msk [vmem:[%s371] sm:$0xff] %vm502, %v499
        %505 = vrot.lane.b32.xlu0 %v499, 96
        %v506 = vpop.permute.xlu0 %505
        %508 = vst.msk [vmem:[%s378] sm:$0xff] %vm502, %v506
        %509 = vrot.lane.b32.xlu0 %v499, 64
        %v510 = vpop.permute.xlu0 %509
        %512 = vst.msk [vmem:[%s385] sm:$0xff] %vm502, %v510
        %513 = vrot.lane.b32.xlu0 %v499, 120
        %v514 = vpop.permute.xlu0 %513
        %s516 = scalar_lea.vmem %s371, 8 [#allocation11]
        %517 = vst.msk [vmem:[%s516] sm:$0xff] %vm502, %v514
        %518 = vrot.lane.b32.xlu0 %v499, 88
        %v519 = vpop.permute.xlu0 %518
        %s521 = scalar_lea.vmem %s378, 8 [#allocation12]
        %522 = vst.msk [vmem:[%s521] sm:$0xff] %vm502, %v519
        %523 = vrot.lane.b32.xlu0 %v499, 56
        %v524 = vpop.permute.xlu0 %523
        %s526 = scalar_lea.vmem %s385, 8 [#allocation14]
        %527 = vst.msk [vmem:[%s526] sm:$0xff] %vm502, %v524
        %528 = vrot.lane.b32.xlu0 %v499, 112
        %v529 = vpop.permute.xlu0 %528
        %s531 = scalar_lea.vmem %s371, 16 [#allocation11]
        %532 = vst.msk [vmem:[%s531] sm:$0xff] %vm502, %v529
        %533 = vrot.lane.b32.xlu0 %v499, 80
        %v534 = vpop.permute.xlu0 %533
        %s536 = scalar_lea.vmem %s378, 16 [#allocation12]
        %537 = vst.msk [vmem:[%s536] sm:$0xff] %vm502, %v534
        %538 = vrot.lane.b32.xlu0 %v499, 48
        %v539 = vpop.permute.xlu0 %538
        %s541 = scalar_lea.vmem %s385, 16 [#allocation14]
        %542 = vst.msk [vmem:[%s541] sm:$0xff] %vm502, %v539
        %543 = vrot.lane.b32.xlu0 %v499, 104
        %v544 = vpop.permute.xlu0 %543
        %s546 = scalar_lea.vmem %s371, 24 [#allocation11]
        %547 = vst.msk [vmem:[%s546] sm:$0xff] %vm502, %v544
        %548 = vrot.lane.b32.xlu0 %v499, 72
        %v549 = vpop.permute.xlu0 %548
        %s551 = scalar_lea.vmem %s378, 24 [#allocation12]
        %552 = vst.msk [vmem:[%s551] sm:$0xff] %vm502, %v549
        %553 = vrot.lane.b32.xlu0 %v499, 40
        %v554 = vpop.permute.xlu0 %553
        %s556 = scalar_lea.vmem %s385, 24 [#allocation14]
        %557 = vst.msk [vmem:[%s556] sm:$0xff] %vm502, %v554
        %s558 = sand.u32 %s164, 1
        %s559 = scalar_lea.sflag [#allocation4], %s558
        %s560 = sand.u32 %s164, 1
        %s561 = smul.addr %s560, 32
        %s562 = scalar_lea.vmem [#allocation11], %s561
        %s563 = sand.u32 %s30, 1
        %s564 = scalar_lea.sflag [#allocation13], %s563
        %s565 = sand.u32 %s192, 1
        %s566 = smul.addr %s565, 32
        %s567 = scalar_lea.vmem [#allocation12], %s566
        %s568 = sand.u32 %s30, 1
        %s569 = scalar_lea.sflag [#allocation13], %s568
        %s570 = sand.u32 %s220, 1
        %s571 = smul.addr %s570, 32
        %s572 = scalar_lea.vmem [#allocation14], %s571
        // Predicated region
        $region61: #{tpu_custom_call.1} parent=39 // pred_check
          %p573 = pneg %p174
        $region62: #{tpu_custom_call.1} parent=39 // pred_check_branch
          %575 = sbr.rel (%p573) target = $region64
        $region63: #{tpu_custom_call.1} parent=39 // pred_region
          %s577 = ssub.s32 512, 512
          %578 = vsyncadd %s559, %s577
          %s579 = smul.addr %s34, 8
          %s580 = sadd.s32 %s35, %s579
          %s581 = smul.addr %s580, 128
          %s582 = scalar_lea.hbm %s5, %s581
          %s583 = sshll.u32 %s562, 4
          %s584 = int_to_ptr.vmem [resolvable:$true] %s583
          %589 = dma.vmem_to_hbm [thread:$0]  %s584, 512, %s582, %s559, 128, 256, 8
        $region64: #{tpu_custom_call.1} parent=39 // pred_fallthru
          _
        // Predicated region
        $region65: #{tpu_custom_call.1} parent=39 // pred_check
          %p590 = pneg %p202
        $region66: #{tpu_custom_call.1} parent=39 // pred_check_branch
          %592 = sbr.rel (%p590) target = $region68
        $region67: #{tpu_custom_call.1} parent=39 // pred_region
          %s594 = ssub.s32 512, 512
          %595 = vsyncadd %s564, %s594
          %s596 = smul.addr %s34, 8
          %s597 = sadd.s32 %s35, %s596
          %s598 = smul.addr %s597, 128
          %s599 = scalar_lea.hbm %s6, %s598
          %s600 = sshll.u32 %s567, 4
          %s601 = int_to_ptr.vmem [resolvable:$true] %s600
          %606 = dma.vmem_to_hbm [thread:$0]  %s601, 512, %s599, %s564, 128, 256, 8
        $region68: #{tpu_custom_call.1} parent=39 // pred_fallthru
          _
        // Predicated region
        $region69: #{tpu_custom_call.1} parent=39 // pred_check
          %p607 = pneg %p230
        $region70: #{tpu_custom_call.1} parent=39 // pred_check_branch
          %609 = sbr.rel (%p607) target = $region72
        $region71: #{tpu_custom_call.1} parent=39 // pred_region
          %s611 = ssub.s32 512, 512
          %612 = vsyncadd %s569, %s611
          %s613 = smul.addr %s34, 8
          %s614 = sadd.s32 %s35, %s613
          %s615 = smul.addr %s614, 128
          %s616 = scalar_lea.hbm %s7, %s615
          %s617 = sshll.u32 %s572, 4
          %s618 = int_to_ptr.vmem [resolvable:$true] %s617
          %623 = dma.vmem_to_hbm [thread:$0]  %s618, 512, %s616, %s569, 128, 256, 8
        $region72: #{tpu_custom_call.1} parent=39 // pred_fallthru
          _
      $region40: #{tpu_custom_call.1} parent=5 // pred_fallthru
        _
      %p624 = scmp.le.s32.totalorder 2, %s25
      // Predicated region
      $region73: #{tpu_custom_call.1} parent=5 // pred_check
        %p625 = pneg %p624
      $region74: #{tpu_custom_call.1} parent=5 // pred_check_branch
        %627 = sbr.rel (%p625) target = $region76
      $region75: #{tpu_custom_call.1} parent=5 // pred_region
        %s628 = ssub.s32 %s25, 2
        // Predicated region
        $region77: #{tpu_custom_call.1} parent=75 // pred_check
          %p629 = pneg %p180
        $region78: #{tpu_custom_call.1} parent=75 // pred_check_branch
          %631 = sbr.rel (%p629) target = $region80
        $region79: #{tpu_custom_call.1} parent=75 // pred_region
          %s632 = sand.u32 %s165, 1
          %s633 = scalar_lea.sflag [#allocation4], %s632
          %s634 = sand.u32 %s165, 1
          %s635 = smul.addr %s634, 32
          %s636 = scalar_lea.vmem [#allocation11], %s635
          %637 = dma.done %s633, 512
        $region80: #{tpu_custom_call.1} parent=75 // pred_fallthru
          _
        // Predicated region
        $region81: #{tpu_custom_call.1} parent=75 // pred_check
          %p638 = pneg %p208
        $region82: #{tpu_custom_call.1} parent=75 // pred_check_branch
          %640 = sbr.rel (%p638) target = $region84
        $region83: #{tpu_custom_call.1} parent=75 // pred_region
          %s641 = sand.u32 %s31, 1
          %s642 = scalar_lea.sflag [#allocation13], %s641
          %s643 = sand.u32 %s193, 1
          %s644 = smul.addr %s643, 32
          %s645 = scalar_lea.vmem [#allocation12], %s644
          %646 = dma.done %s642, 512
        $region84: #{tpu_custom_call.1} parent=75 // pred_fallthru
          _
        // Predicated region
        $region85: #{tpu_custom_call.1} parent=75 // pred_check
          %p647 = pneg %p236
        $region86: #{tpu_custom_call.1} parent=75 // pred_check_branch
          %649 = sbr.rel (%p647) target = $region88
        $region87: #{tpu_custom_call.1} parent=75 // pred_region
          %s650 = sand.u32 %s31, 1
          %s651 = scalar_lea.sflag [#allocation13], %s650
          %s652 = sand.u32 %s221, 1
          %s653 = smul.addr %s652, 32
          %s654 = scalar_lea.vmem [#allocation14], %s653
          %655 = dma.done %s651, 512
        $region88: #{tpu_custom_call.1} parent=75 // pred_fallthru
          _
      $region76: #{tpu_custom_call.1} parent=5 // pred_fallthru
        _
    $region6: #{tpu_custom_call.1} parent=1 // loop_footer
      %s29 = sadd.s32 1, %s25
    $region7: #{tpu_custom_call.1} parent=1 // loop_footer_branch
      %24 = sbr.rel target = $region3
    $region8: #{tpu_custom_call.1} parent=1 // loop_exit
      _
    %656 = vsyncpa [#allocation3], 1
    %s657 = scalar_lea.sflag [#allocation3], 1
    %658 = vsyncpa %s657, 1
    %659 = vsyncpa [#allocation6], 1
    %660 = vsyncpa [#allocation9], 1
    %661 = vsyncpa [#allocation4], 1
    %s662 = scalar_lea.sflag [#allocation4], 1
    %663 = vsyncpa %s662, 1
    %664 = vsyncpa [#allocation13], 1
    %s665 = scalar_lea.sflag [#allocation13], 1
    %666 = vsyncpa %s665, 1

// kernel: tpu_custom_call.1
$region0: #{tpu_custom_call.1}
  #allocation0 [shape = 'u32[]', space=smem, size = 0x4, offset = 0x4, fixed_abs, tag = 'smem constant byte address 0x4 - core index']
  #allocation1 [shape = 'u32[144,128]{1,0:T(1,128)}', space=vmem, size = 0x12000, scoped, tag = 'internal scratch']
  %s0 = inlined_call_operand.hbm [shape: f32[2,16,32], index: 0, kind: input, shape index: {}]
  %s1 = inlined_call_operand.hbm [shape: f32[1,32], index: 1, kind: input, shape index: {}]
  %s2 = inlined_call_operand.hbm [shape: f32[1,32], index: 2, kind: input, shape index: {}]
  %s3 = inlined_call_operand.hbm [shape: f32[32,96], index: 3, kind: input, shape index: {}]
  %s4 = inlined_call_operand.hbm [shape: f32[1,96], index: 4, kind: input, shape index: {}]
  %s5 = inlined_call_operand.hbm [shape: f32[2,4,16,8], index: 5, kind: output, shape index: {0}]
  %s6 = inlined_call_operand.hbm [shape: f32[2,4,16,8], index: 6, kind: output, shape index: {1}]
  %s7 = inlined_call_operand.hbm [shape: f32[2,4,16,8], index: 7, kind: output, shape index: {2}]
  %8 = xla_tuple %s5, %s6, %s7
  %s9 = sld [smem:[#allocation0]]
  $region89: #{tpu_custom_call.1} parent=0
    _
  %s11 = ssub.s32 1, %s9
  %s12 = scalar_select 0, %s11, %s9
  $region1: #{tpu_custom_call.1} parent=0
    #allocation2 [shape = 'u8[8192]{0}', space=vmem, size = 0x2000, scoped, tag = 'input window, operand 0']
    #allocation3 [shape = 's32[2]{0}', space=sflag, size = 0x8, scoped, tag = 'scoped memory for tpu_custom_call.1']
    #allocation4 [shape = 's32[2]{0}', space=sflag, size = 0x8, scoped, tag = 'scoped memory for tpu_custom_call.1']
    #allocation5 [shape = 'u8[512]{0}', space=vmem, size = 0x400, scoped, tag = 'input window, operand 1, single buffered']
    #allocation6 [shape = 's32[1]{0}', space=sflag, size = 0x4, scoped, tag = 'scoped memory for tpu_custom_call.1']
    #allocation7 [shape = 'u8[512]{0}', space=vmem, size = 0x400, scoped, tag = 'input window, operand 2, single buffered']
    #allocation8 [shape = 'u8[16384]{0}', space=vmem, size = 0x4000, scoped, tag = 'input window, operand 3, single buffered']
    #allocation9 [shape = 's32[1]{0}', space=sflag, size = 0x4, scoped, tag = 'scoped memory for tpu_custom_call.1']
    #allocation10 [shape = 'u8[512]{0}', space=vmem, size = 0x400, scoped, tag = 'input window, operand 4, single buffered']
    #allocation11 [shape = 'u8[32768]{0}', space=vmem, size = 0x8000, scoped, tag = 'output window, operand 0']
    #allocation12 [shape = 'u8[32768]{0}', space=vmem, size = 0x8000, scoped, tag = 'output window, operand 1']
    #allocation13 [shape = 's32[2]{0}', space=sflag, size = 0x8, scoped, tag = 'scoped memory for tpu_custom_call.1']
    #allocation14 [shape = 'u8[32768]{0}', space=vmem, size = 0x8000, scoped, tag = 'output window, operand 2']
    %13 = vsyncpa [#allocation3], 0
    %s14 = scalar_lea.sflag [#allocation3], 1
    %15 = vsyncpa %s14, 0
    %16 = vsyncpa [#allocation6], 0
    %17 = vsyncpa [#allocation9], 0
    %18 = vsyncpa [#allocation4], 0
    %s19 = scalar_lea.sflag [#allocation4], 1
    %20 = vsyncpa %s19, 0
    %21 = vsyncpa [#allocation13], 0
    %s22 = scalar_lea.sflag [#allocation13], 1
    %23 = vsyncpa %s22, 0
    loop: start=0, step=1, limit=6
    $region2: #{tpu_custom_call.1} parent=1 // loop_pre_header
      _
    $region3: #{tpu_custom_call.1} parent=1 // loop_header
      %s25 = sphi 0, %s29
      %p26 = scmp.ge.s32.totalorder %s25, 6
      %s32 = sphi 0, %s44
      %s33 = sphi 0, %s40
      %s34 = sphi 0, %s32
      %s35 = sphi 0, %s33
      %s36 = sphi 0, %s34
      %s37 = sphi 0, %s35
      %s49 = sphi 0, %s51
      %s52 = sphi 0, %s49
      %s53 = sphi 0, %s52
      %s69 = sphi 0, %s53
      %s73 = sphi 0, %s73
      %s75 = sphi 0, %s73
      %s76 = sphi 0, %s75
      %s90 = sphi 0, %s76
      %s94 = sphi 0, %s94
      %s96 = sphi 0, %s94
      %s97 = sphi 0, %s96
      %s111 = sphi 0, %s97
      %s115 = sphi 0, %s115
      %s117 = sphi 0, %s115
      %s118 = sphi 0, %s117
      %s132 = sphi 0, %s118
      %s136 = sphi 0, %s136
      %s138 = sphi 0, %s136
      %s139 = sphi 0, %s138
      %s153 = sphi 0, %s139
      %s161 = sphi 0, %s163
      %s164 = sphi 0, %s161
      %s165 = sphi 0, %s164
      %s181 = sphi 0, %s165
      %s189 = sphi 0, %s191
      %s192 = sphi 0, %s189
      %s193 = sphi 0, %s192
      %s209 = sphi 0, %s193
      %s217 = sphi 0, %s219
      %s220 = sphi 0, %s217
      %s221 = sphi 0, %s220
      %s237 = sphi 0, %s221
    $region4: #{tpu_custom_call.1} parent=1 // loop_header_branch
      %28 = sbr.rel (%p26) target = $region8
    $region5: #{tpu_custom_call.1} parent=1 // loop_body
      %s30 = ssub.s32 %s25, 1
      %s31 = ssub.s32 %s25, 2
      %s38 = sadd.s32 1, %s33
      %p39 = scmp.ge.s32.totalorder %s38, 2
      %s40 = scalar_select %p39, 0, %s38
      %s41 = sadd.s32 1, %s32
      %s42 = scalar_select %p39, %s41, %s32
      %p43 = scmp.ge.s32.totalorder %s42, 2
      %s44 = scalar_select %p43, 0, %s42
      %s45 = ssub.s32 %s32, %s44
      %s46 = ssub.s32 %s33, %s40
      %s47 = sor.u32 %s45, %s46
      %p48 = scmp.eq.s32.totalorder %s47, 0
      %s50 = sadd.s32 %s49, 1
      %s51 = scalar_select %p48, %s49, %s50
      %p54 = pneg %p48
      %p55 = scmp.eq.s32.totalorder %s25, 3
      %p56 = por %p54, %p55
      %p57 = scmp.ne.s32.totalorder %s49, %s52
      %p58 = scmp.eq.s32.totalorder %s25, 0
      %p59 = por %p57, %p58
      %p60 = scmp.ne.s32.totalorder %s49, %s52
      %p61 = scmp.eq.s32.totalorder %s30, 3
      %p62 = por %p60, %p61
      %p63 = scmp.ne.s32.totalorder %s52, %s53
      %p64 = scmp.eq.s32.totalorder %s30, 0
      %p65 = por %p63, %p64
      %p66 = scmp.ne.s32.totalorder %s52, %s53
      %p67 = scmp.eq.s32.totalorder %s31, 3
      %p68 = por %p66, %p67
      %p70 = scmp.ne.s32.totalorder %s53, %s69
      %p71 = scmp.eq.s32.totalorder %s31, 0
      %p72 = por %p70, %p71
      %s74 = sadd.s32 %s73, 1
      %p77 = scmp.eq.s32.totalorder %s25, 3
      %p78 = scmp.ne.s32.totalorder %s73, %s75
      %p79 = scmp.eq.s32.totalorder %s25, 0
      %p80 = por %p78, %p79
      %p81 = scmp.ne.s32.totalorder %s73, %s75
      %p82 = scmp.eq.s32.totalorder %s30, 3
      %p83 = por %p81, %p82
      %p84 = scmp.ne.s32.totalorder %s75, %s76
      %p85 = scmp.eq.s32.totalorder %s30, 0
      %p86 = por %p84, %p85
      %p87 = scmp.ne.s32.totalorder %s75, %s76
      %p88 = scmp.eq.s32.totalorder %s31, 3
      %p89 = por %p87, %p88
      %p91 = scmp.ne.s32.totalorder %s76, %s90
      %p92 = scmp.eq.s32.totalorder %s31, 0
      %p93 = por %p91, %p92
      %s95 = sadd.s32 %s94, 1
      %p98 = scmp.eq.s32.totalorder %s25, 3
      %p99 = scmp.ne.s32.totalorder %s94, %s96
      %p100 = scmp.eq.s32.totalorder %s25, 0
      %p101 = por %p99, %p100
      %p102 = scmp.ne.s32.totalorder %s94, %s96
      %p103 = scmp.eq.s32.totalorder %s30, 3
      %p104 = por %p102, %p103
      %p105 = scmp.ne.s32.totalorder %s96, %s97
      %p106 = scmp.eq.s32.totalorder %s30, 0
      %p107 = por %p105, %p106
      %p108 = scmp.ne.s32.totalorder %s96, %s97
      %p109 = scmp.eq.s32.totalorder %s31, 3
      %p110 = por %p108, %p109
      %p112 = scmp.ne.s32.totalorder %s97, %s111
      %p113 = scmp.eq.s32.totalorder %s31, 0
      %p114 = por %p112, %p113
      %s116 = sadd.s32 %s115, 1
      %p119 = scmp.eq.s32.totalorder %s25, 3
      %p120 = scmp.ne.s32.totalorder %s115, %s117
      %p121 = scmp.eq.s32.totalorder %s25, 0
      %p122 = por %p120, %p121
      %p123 = scmp.ne.s32.totalorder %s115, %s117
      %p124 = scmp.eq.s32.totalorder %s30, 3
      %p125 = por %p123, %p124
      %p126 = scmp.ne.s32.totalorder %s117, %s118
      %p127 = scmp.eq.s32.totalorder %s30, 0
      %p128 = por %p126, %p127
      %p129 = scmp.ne.s32.totalorder %s117, %s118
      %p130 = scmp.eq.s32.totalorder %s31, 3
      %p131 = por %p129, %p130
      %p133 = scmp.ne.s32.totalorder %s118, %s132
      %p134 = scmp.eq.s32.totalorder %s31, 0
      %p135 = por %p133, %p134
      %s137 = sadd.s32 %s136, 1
      %p140 = scmp.eq.s32.totalorder %s25, 3
      %p141 = scmp.ne.s32.totalorder %s136, %s138
      %p142 = scmp.eq.s32.totalorder %s25, 0
      %p143 = por %p141, %p142
      %p144 = scmp.ne.s32.totalorder %s136, %s138
      %p145 = scmp.eq.s32.totalorder %s30, 3
      %p146 = por %p144, %p145
      %p147 = scmp.ne.s32.totalorder %s138, %s139
      %p148 = scmp.eq.s32.totalorder %s30, 0
      %p149 = por %p147, %p148
      %p150 = scmp.ne.s32.totalorder %s138, %s139
      %p151 = scmp.eq.s32.totalorder %s31, 3
      %p152 = por %p150, %p151
      %p154 = scmp.ne.s32.totalorder %s139, %s153
      %p155 = scmp.eq.s32.totalorder %s31, 0
      %p156 = por %p154, %p155
      %s157 = ssub.s32 %s32, %s44
      %s158 = ssub.s32 %s33, %s40
      %s159 = sor.u32 %s157, %s158
      %p160 = scmp.eq.s32.totalorder %s159, 0
      %s162 = sadd.s32 %s161, 1
      %s163 = scalar_select %p160, %s161, %s162
      %p166 = pneg %p160
      %p167 = scmp.eq.s32.totalorder %s25, 3
      %p168 = por %p166, %p167
      %p169 = scmp.ne.s32.totalorder %s161, %s164
      %p170 = scmp.eq.s32.totalorder %s25, 0
      %p171 = por %p169, %p170
      %p172 = scmp.ne.s32.totalorder %s161, %s164
      %p173 = scmp.eq.s32.totalorder %s30, 3
      %p174 = por %p172, %p173
      %p175 = scmp.ne.s32.totalorder %s164, %s165
      %p176 = scmp.eq.s32.totalorder %s30, 0
      %p177 = por %p175, %p176
      %p178 = scmp.ne.s32.totalorder %s164, %s165
      %p179 = scmp.eq.s32.totalorder %s31, 3
      %p180 = por %p178, %p179
      %p182 = scmp.ne.s32.totalorder %s165, %s181
      %p183 = scmp.eq.s32.totalorder %s31, 0
      %p184 = por %p182, %p183
      %s185 = ssub.s32 %s32, %s44
      %s186 = ssub.s32 %s33, %s40
      %s187 = sor.u32 %s185, %s186
      %p188 = scmp.eq.s32.totalorder %s187, 0
      %s190 = sadd.s32 %s189, 1
      %s191 = scalar_select %p188, %s189, %s190
      %p194 = pneg %p188
      %p195 = scmp.eq.s32.totalorder %s25, 3
      %p196 = por %p194, %p195
      %p197 = scmp.ne.s32.totalorder %s189, %s192
      %p198 = scmp.eq.s32.totalorder %s25, 0
      %p199 = por %p197, %p198
      %p200 = scmp.ne.s32.totalorder %s189, %s192
      %p201 = scmp.eq.s32.totalorder %s30, 3
      %p202 = por %p200, %p201
      %p203 = scmp.ne.s32.totalorder %s192, %s193
      %p204 = scmp.eq.s32.totalorder %s30, 0
      %p205 = por %p203, %p204
      %p206 = scmp.ne.s32.totalorder %s192, %s193
      %p207 = scmp.eq.s32.totalorder %s31, 3
      %p208 = por %p206, %p207
      %p210 = scmp.ne.s32.totalorder %s193, %s209
      %p211 = scmp.eq.s32.totalorder %s31, 0
      %p212 = por %p210, %p211
      %s213 = ssub.s32 %s32, %s44
      %s214 = ssub.s32 %s33, %s40
      %s215 = sor.u32 %s213, %s214
      %p216 = scmp.eq.s32.totalorder %s215, 0
      %s218 = sadd.s32 %s217, 1
      %s219 = scalar_select %p216, %s217, %s218
      %p222 = pneg %p216
      %p223 = scmp.eq.s32.totalorder %s25, 3
      %p224 = por %p222, %p223
      %p225 = scmp.ne.s32.totalorder %s217, %s220
      %p226 = scmp.eq.s32.totalorder %s25, 0
      %p227 = por %p225, %p226
      %p228 = scmp.ne.s32.totalorder %s217, %s220
      %p229 = scmp.eq.s32.totalorder %s30, 3
      %p230 = por %p228, %p229
      %p231 = scmp.ne.s32.totalorder %s220, %s221
      %p232 = scmp.eq.s32.totalorder %s30, 0
      %p233 = por %p231, %p232
      %p234 = scmp.ne.s32.totalorder %s220, %s221
      %p235 = scmp.eq.s32.totalorder %s31, 3
      %p236 = por %p234, %p235
      %p238 = scmp.ne.s32.totalorder %s221, %s237
      %p239 = scmp.eq.s32.totalorder %s31, 0
      %p240 = por %p238, %p239
      %p241 = scmp.le.s32.totalorder 1, %s25
      %p242 = scmp.lt.s32.totalorder %s25, 5
      %p243 = pnand %p241, %p242
      %p244 = pneg %p243
      // Predicated region
      $region9: #{tpu_custom_call.1} parent=5 // pred_check
        _
      $region10: #{tpu_custom_call.1} parent=5 // pred_check_branch
        %246 = sbr.rel (%p243) target = $region12
      $region11: #{tpu_custom_call.1} parent=5 // pred_region
        %s247 = ssub.s32 %s25, 1
        // Predicated region
        $region13: #{tpu_custom_call.1} parent=11 // pred_check
          %p248 = pneg %p86
        $region14: #{tpu_custom_call.1} parent=11 // pred_check_branch
          %250 = sbr.rel (%p248) target = $region16
        $region15: #{tpu_custom_call.1} parent=11 // pred_region
          %s252 = ssub.s32 16, 16
          %253 = vsyncadd [#allocation6], %s252
          %s255 = sshll.u32 [#allocation5], 4
          %s256 = int_to_ptr.vmem [resolvable:$true] %s255
          %258 = dma.hbm_to_vmem [thread:$0]  %s1, 16, %s256, [#allocation6]
        $region16: #{tpu_custom_call.1} parent=11 // pred_fallthru
          _
        // Predicated region
        $region17: #{tpu_custom_call.1} parent=11 // pred_check
          %p259 = pneg %p107
        $region18: #{tpu_custom_call.1} parent=11 // pred_check_branch
          %261 = sbr.rel (%p259) target = $region20
        $region19: #{tpu_custom_call.1} parent=11 // pred_region
          %s263 = ssub.s32 16, 16
          %264 = vsyncadd [#allocation6], %s263
          %s266 = sshll.u32 [#allocation7], 4
          %s267 = int_to_ptr.vmem [resolvable:$true] %s266
          %269 = dma.hbm_to_vmem [thread:$0]  %s2, 16, %s267, [#allocation6]
        $region20: #{tpu_custom_call.1} parent=11 // pred_fallthru
          _
        // Predicated region
        $region21: #{tpu_custom_call.1} parent=11 // pred_check
          %p270 = pneg %p128
        $region22: #{tpu_custom_call.1} parent=11 // pred_check_branch
          %272 = sbr.rel (%p270) target = $region24
        $region23: #{tpu_custom_call.1} parent=11 // pred_region
          %s274 = ssub.s32 512, 512
          %275 = vsyncadd [#allocation9], %s274
          %s276 = sshll.u32 [#allocation8], 4
          %s277 = int_to_ptr.vmem [resolvable:$true] %s276
          %282 = dma.hbm_to_vmem [thread:$0]  %s3, 512, %s277, [#allocation9], 128, 128, 8
        $region24: #{tpu_custom_call.1} parent=11 // pred_fallthru
          _
        // Predicated region
        $region25: #{tpu_custom_call.1} parent=11 // pred_check
          %p283 = pneg %p149
        $region26: #{tpu_custom_call.1} parent=11 // pred_check_branch
          %285 = sbr.rel (%p283) target = $region28
        $region27: #{tpu_custom_call.1} parent=11 // pred_region
          %s287 = ssub.s32 16, 16
          %288 = vsyncadd [#allocation9], %s287
          %s290 = sshll.u32 [#allocation10], 4
          %s291 = int_to_ptr.vmem [resolvable:$true] %s290
          %293 = dma.hbm_to_vmem [thread:$0]  %s4, 16, %s291, [#allocation9]
        $region28: #{tpu_custom_call.1} parent=11 // pred_fallthru
          _
      $region12: #{tpu_custom_call.1} parent=5 // pred_fallthru
        _
      %p294 = scmp.lt.s32.totalorder %s25, 4
      // Predicated region
      $region29: #{tpu_custom_call.1} parent=5 // pred_check
        %p295 = pneg %p294
      $region30: #{tpu_custom_call.1} parent=5 // pred_check_branch
        %297 = sbr.rel (%p295) target = $region32
      $region31: #{tpu_custom_call.1} parent=5 // pred_region
        // Predicated region
        $region33: #{tpu_custom_call.1} parent=31 // pred_check
          %p298 = pneg %p59
        $region34: #{tpu_custom_call.1} parent=31 // pred_check_branch
          %300 = sbr.rel (%p298) target = $region36
        $region35: #{tpu_custom_call.1} parent=31 // pred_region
          %s301 = sand.u32 %s49, 1
          %s302 = scalar_lea.sflag [#allocation3], %s301
          %s303 = sand.u32 %s49, 1
          %s304 = smul.addr %s303, 8
          %s305 = scalar_lea.vmem [#allocation2], %s304
          %s307 = ssub.s32 128, 128
          %308 = vsyncadd %s302, %s307
          %s309 = smul.addr %s32, 2
          %s310 = sadd.s32 %s33, %s309
          %s311 = smul.addr %s310, 128
          %s312 = scalar_lea.hbm %s0, %s311
          %s314 = sshll.u32 %s305, 4
          %s315 = int_to_ptr.vmem [resolvable:$true] %s314
          %317 = dma.hbm_to_vmem [thread:$0]  %s312, 128, %s315, %s302
        $region36: #{tpu_custom_call.1} parent=31 // pred_fallthru
          _
      $region32: #{tpu_custom_call.1} parent=5 // pred_fallthru
        _
      %p318 = scmp.le.s32.totalorder 1, %s25
      %p319 = scmp.lt.s32.totalorder %s25, 5
      %p320 = pnand %p318, %p319
      %p321 = pneg %p320
      // Predicated region
      $region37: #{tpu_custom_call.1} parent=5 // pred_check
        _
      $region38: #{tpu_custom_call.1} parent=5 // pred_check_branch
        %323 = sbr.rel (%p320) target = $region40
      $region39: #{tpu_custom_call.1} parent=5 // pred_region
        %s324 = ssub.s32 %s25, 1
        %s325 = sand.u32 %s52, 1
        %s326 = scalar_lea.sflag [#allocation3], %s325
        %s327 = sand.u32 %s52, 1
        %s328 = smul.addr %s327, 8
        %s329 = scalar_lea.vmem [#allocation2], %s328
        // Predicated region
        $region41: #{tpu_custom_call.1} parent=39 // pred_check
          %p330 = pneg %p65
        $region42: #{tpu_custom_call.1} parent=39 // pred_check_branch
          %332 = sbr.rel (%p330) target = $region44
        $region43: #{tpu_custom_call.1} parent=39 // pred_region
          %333 = dma.done %s326, 128
        $region44: #{tpu_custom_call.1} parent=39 // pred_fallthru
          _
        // Predicated region
        $region45: #{tpu_custom_call.1} parent=39 // pred_check
          %p334 = pneg %p86
        $region46: #{tpu_custom_call.1} parent=39 // pred_check_branch
          %336 = sbr.rel (%p334) target = $region48
        $region47: #{tpu_custom_call.1} parent=39 // pred_region
          %337 = dma.done [#allocation6], 16
        $region48: #{tpu_custom_call.1} parent=39 // pred_fallthru
          _
        // Predicated region
        $region49: #{tpu_custom_call.1} parent=39 // pred_check
          %p338 = pneg %p107
        $region50: #{tpu_custom_call.1} parent=39 // pred_check_branch
          %340 = sbr.rel (%p338) target = $region52
        $region51: #{tpu_custom_call.1} parent=39 // pred_region
          %341 = dma.done [#allocation6], 16
        $region52: #{tpu_custom_call.1} parent=39 // pred_fallthru
          _
        // Predicated region
        $region53: #{tpu_custom_call.1} parent=39 // pred_check
          %p342 = pneg %p128
        $region54: #{tpu_custom_call.1} parent=39 // pred_check_branch
          %344 = sbr.rel (%p342) target = $region56
        $region55: #{tpu_custom_call.1} parent=39 // pred_region
          %345 = dma.done [#allocation9], 512
        $region56: #{tpu_custom_call.1} parent=39 // pred_fallthru
          _
        // Predicated region
        $region57: #{tpu_custom_call.1} parent=39 // pred_check
          %p346 = pneg %p149
        $region58: #{tpu_custom_call.1} parent=39 // pred_check_branch
          %348 = sbr.rel (%p346) target = $region60
        $region59: #{tpu_custom_call.1} parent=39 // pred_region
          %349 = dma.done [#allocation9], 16
        $region60: #{tpu_custom_call.1} parent=39 // pred_fallthru
          _
        %s350 = sand.u32 %s52, 1
        %s351 = scalar_lea.sflag [#allocation3], %s350
        %s352 = sand.u32 %s52, 1
        %s353 = smul.addr %s352, 8
        %s354 = scalar_lea.vmem [#allocation2], %s353
        %p355 = pneg %p65
        %p356 = pneg %p62
        %p357 = pneg %p86
        %p358 = pneg %p83
        %p359 = pneg %p107
        %p360 = pneg %p104
        %p361 = pneg %p128
        %p362 = pneg %p125
        %p363 = pneg %p149
        %p364 = pneg %p146
        %p365 = pneg %p177
        %p366 = pneg %p174
        %s367 = sand.u32 %s164, 1
        %s368 = scalar_lea.sflag [#allocation4], %s367
        %s369 = sand.u32 %s164, 1
        %s370 = smul.addr %s369, 32
        %s371 = scalar_lea.vmem [#allocation11], %s370
        %p372 = pneg %p205
        %p373 = pneg %p202
        %s374 = sand.u32 %s30, 1
        %s375 = scalar_lea.sflag [#allocation13], %s374
        %s376 = sand.u32 %s192, 1
        %s377 = smul.addr %s376, 32
        %s378 = scalar_lea.vmem [#allocation12], %s377
        %p379 = pneg %p233
        %p380 = pneg %p230
        %s381 = sand.u32 %s30, 1
        %s382 = scalar_lea.sflag [#allocation13], %s381
        %s383 = sand.u32 %s220, 1
        %s384 = smul.addr %s383, 32
        %s385 = scalar_lea.vmem [#allocation14], %s384
        %v386 = vld [vmem:[%s329] sm:$0xff]
        %v387 = vld [vmem:[#allocation5] sm:$0x1]
        %v388 = vld [vmem:[#allocation7] sm:$0x1]
        %vm389 = vcmask 261120
        %v390 = vsel %vm389, %v386, 0.0
        %391 = vadd.xlane.f32.xlu0 %v390
        %v392 = vpop.xlane.xlu0 %391
        %v393 = vrcp.pop 32.0
        %v394 = vmul.f32 %v392, %v393
        %v395 = vsub.f32 %v386, %v394
        %v396 = vmul.f32 %v395, %v395
        %v397 = vsel %vm389, %v396, 0.0
        %398 = vadd.xlane.f32.xlu0 %v397
        %v399 = vpop.xlane.xlu0 %398
        %v400 = vmul.f32 %v399, %v393
        %v401 = vadd.f32 %v400, 1e-06
        %v402 = vrsqrt.pop %v401
        %v403 = vmul.f32 %v395, %v402
        %v405 = vlaneseq
        %v406 = vshrl.u32 %v405, 7
        %v407 = vsub.s32 0, %v406
        %v408 = vrot.slane %v387, %v407
        %v410 = vmul.f32 %v403, %v408
        %v412 = vlaneseq
        %v413 = vshrl.u32 %v412, 7
        %v414 = vsub.s32 0, %v413
        %v415 = vrot.slane %v388, %v414
        %v417 = vadd.f32 %v410, %v415
        %v418 = vld [vmem:[#allocation8] sm:$0xff]
        %v419 = vld [vmem:[#allocation8 + $0x8] sm:$0xff]
        %v420 = vld [vmem:[#allocation8 + $0x10] sm:$0xff]
        %v421 = vld [vmem:[#allocation8 + $0x18] sm:$0xff]
        %v422 = vld [vmem:[#allocation10] sm:$0x1]
        %v424 = vlaneseq
        %v425 = vshrl.u32 %v424, 7
        %v426 = vsub.s32 0, %v425
        %v427 = vrot.slane %v422, %v426
        %v430 = vsel %vm389, %v417, 0
        %432 = vmatprep.subr.mxu0 0.0
        %433 = vmatpush1.msra.mxu0 %v418
        %434 = vmatprep.subr.mxu0 0.0
        %435 = vmatpush1.msra.mxu0 %v419
        %436 = vmatprep.subr.mxu0 0.0
        %437 = vmatpush1.msra.mxu0 %v420
        %438 = vmatprep.subr.mxu0 0.0
        %439 = vmatpush1.msra.mxu0 %v421
        %440 = vmatprep.subr.mxu0 0.0
        %441 = vmatpush1.msra.mxu0 0.0
        %442 = vmatprep.subr.mxu0 0.0
        %443 = vmatpush1.msra.mxu0 0.0
        %444 = vmatprep.subr.mxu0 0.0
        %445 = vmatpush1.msra.mxu0 0.0
        %446 = vmatprep.subr.mxu0 0.0
        %447 = vmatpush1.msra.mxu0 0.0
        %448 = vmatprep.subr.mxu0 0.0
        %449 = vmatpush1.msra.mxu0 0.0
        %450 = vmatprep.subr.mxu0 0.0
        %451 = vmatpush1.msra.mxu0 0.0
        %452 = vmatprep.subr.mxu0 0.0
        %453 = vmatpush1.msra.mxu0 0.0
        %454 = vmatprep.subr.mxu0 0.0
        %455 = vmatpush1.msra.mxu0 0.0
        %456 = vmatprep.subr.mxu0 0.0
        %457 = vmatpush1.msra.mxu0 0.0
        %458 = vmatprep.subr.mxu0 0.0
        %459 = vmatpush1.msra.mxu0 0.0
        %460 = vmatprep.subr.mxu0 0.0
        %461 = vmatpush1.msra.mxu0 0.0
        %462 = vmatprep.subr.mxu0 0.0
        %463 = vmatpush1.msra.mxu0 0.0
        %464 = vmatprep.subr.mxu0 0.0
        %465 = vmatpush1.msra.mxu0 0.0
        %466 = vmatprep.subr.mxu0 0.0
        %467 = vmatpush1.msra.mxu0 0.0
        %468 = vmatprep.subr.mxu0 0.0
        %469 = vmatpush1.msra.mxu0 0.0
        %470 = vmatprep.subr.mxu0 0.0
        %471 = vmatpush1.msra.mxu0 0.0
        %472 = vmatprep.subr.mxu0 0.0
        %473 = vmatpush1.msra.mxu0 0.0
        %474 = vmatprep.subr.mxu0 0.0
        %475 = vmatpush1.msra.mxu0 0.0
        %476 = vmatprep.subr.mxu0 0.0
        %477 = vmatpush1.msra.mxu0 0.0
        %478 = vmatprep.subr.mxu0 0.0
        %479 = vmatpush1.msra.mxu0 0.0
        %480 = vmatprep.subr.mxu0 0.0
        %481 = vmatpush1.msra.mxu0 0.0
        %482 = vmatprep.subr.mxu0 0.0
        %483 = vmatpush1.msra.mxu0 0.0
        %484 = vmatprep.subr.mxu0 0.0
        %485 = vmatpush1.msra.mxu0 0.0
        %486 = vmatprep.subr.mxu0 0.0
        %487 = vmatpush1.msra.mxu0 0.0
        %488 = vmatprep.subr.mxu0 0.0
        %489 = vmatpush1.msra.mxu0 0.0
        %490 = vmatprep.subr.mxu0 0.0
        %491 = vmatpush1.msra.mxu0 0.0
        %492 = vmatprep.subr.mxu0 0.0
        %493 = vmatpush1.msra.mxu0 0.0
        %494 = vmatprep.subr.mxu0 0.0
        %495 = vmatpush1.msra.mxu0 0.0
        %496 = vmatprep.mubr.f32.mxu0 0.0
        %497 = vmatmul.mubr.f32.gmra.mrb[0].mxu0 %v430
        %v498 = vpop.f32.mrb[0].mxu0
        %v499 = vadd.f32 %v427, %v498
        %v500 = vpop.f32.mrb[0].mxu0
        %501 = vdwg.mxu0
        %vm502 = vcmask 64512
        %503 = vst.msk [vmem:[%s371] sm:$0xff] %vm502, %v499
        %505 = vrot.lane.b32.xlu0 %v499, 96
        %v506 = vpop.permute.xlu0 %505
        %508 = vst.msk [vmem:[%s378] sm:$0xff] %vm502, %v506
        %509 = vrot.lane.b32.xlu0 %v499, 64
        %v510 = vpop.permute.xlu0 %509
        %512 = vst.msk [vmem:[%s385] sm:$0xff] %vm502, %v510
        %513 = vrot.lane.b32.xlu0 %v499, 120
        %v514 = vpop.permute.xlu0 %513
        %s516 = scalar_lea.vmem %s371, 8 [#allocation11]
        %517 = vst.msk [vmem:[%s516] sm:$0xff] %vm502, %v514
        %518 = vrot.lane.b32.xlu0 %v499, 88
        %v519 = vpop.permute.xlu0 %518
        %s521 = scalar_lea.vmem %s378, 8 [#allocation12]
        %522 = vst.msk [vmem:[%s521] sm:$0xff] %vm502, %v519
        %523 = vrot.lane.b32.xlu0 %v499, 56
        %v524 = vpop.permute.xlu0 %523
        %s526 = scalar_lea.vmem %s385, 8 [#allocation14]
        %527 = vst.msk [vmem:[%s526] sm:$0xff] %vm502, %v524
        %528 = vrot.lane.b32.xlu0 %v499, 112
        %v529 = vpop.permute.xlu0 %528
        %s531 = scalar_lea.vmem %s371, 16 [#allocation11]
        %532 = vst.msk [vmem:[%s531] sm:$0xff] %vm502, %v529
        %533 = vrot.lane.b32.xlu0 %v499, 80
        %v534 = vpop.permute.xlu0 %533
        %s536 = scalar_lea.vmem %s378, 16 [#allocation12]
        %537 = vst.msk [vmem:[%s536] sm:$0xff] %vm502, %v534
        %538 = vrot.lane.b32.xlu0 %v499, 48
        %v539 = vpop.permute.xlu0 %538
        %s541 = scalar_lea.vmem %s385, 16 [#allocation14]
        %542 = vst.msk [vmem:[%s541] sm:$0xff] %vm502, %v539
        %543 = vrot.lane.b32.xlu0 %v499, 104
        %v544 = vpop.permute.xlu0 %543
        %s546 = scalar_lea.vmem %s371, 24 [#allocation11]
        %547 = vst.msk [vmem:[%s546] sm:$0xff] %vm502, %v544
        %548 = vrot.lane.b32.xlu0 %v499, 72
        %v549 = vpop.permute.xlu0 %548
        %s551 = scalar_lea.vmem %s378, 24 [#allocation12]
        %552 = vst.msk [vmem:[%s551] sm:$0xff] %vm502, %v549
        %553 = vrot.lane.b32.xlu0 %v499, 40
        %v554 = vpop.permute.xlu0 %553
        %s556 = scalar_lea.vmem %s385, 24 [#allocation14]
        %557 = vst.msk [vmem:[%s556] sm:$0xff] %vm502, %v554
        %s558 = sand.u32 %s164, 1
        %s559 = scalar_lea.sflag [#allocation4], %s558
        %s560 = sand.u32 %s164, 1
        %s561 = smul.addr %s560, 32
        %s562 = scalar_lea.vmem [#allocation11], %s561
        %s563 = sand.u32 %s30, 1
        %s564 = scalar_lea.sflag [#allocation13], %s563
        %s565 = sand.u32 %s192, 1
        %s566 = smul.addr %s565, 32
        %s567 = scalar_lea.vmem [#allocation12], %s566
        %s568 = sand.u32 %s30, 1
        %s569 = scalar_lea.sflag [#allocation13], %s568
        %s570 = sand.u32 %s220, 1
        %s571 = smul.addr %s570, 32
        %s572 = scalar_lea.vmem [#allocation14], %s571
        // Predicated region
        $region61: #{tpu_custom_call.1} parent=39 // pred_check
          %p573 = pneg %p174
        $region62: #{tpu_custom_call.1} parent=39 // pred_check_branch
          %575 = sbr.rel (%p573) target = $region64
        $region63: #{tpu_custom_call.1} parent=39 // pred_region
          %s577 = ssub.s32 512, 512
          %578 = vsyncadd %s559, %s577
          %s579 = smul.addr %s34, 8
          %s580 = sadd.s32 %s35, %s579
          %s581 = smul.addr %s580, 128
          %s582 = scalar_lea.hbm %s5, %s581
          %s583 = sshll.u32 %s562, 4
          %s584 = int_to_ptr.vmem [resolvable:$true] %s583
          %589 = dma.vmem_to_hbm [thread:$0]  %s584, 512, %s582, %s559, 128, 256, 8
        $region64: #{tpu_custom_call.1} parent=39 // pred_fallthru
          _
        // Predicated region
        $region65: #{tpu_custom_call.1} parent=39 // pred_check
          %p590 = pneg %p202
        $region66: #{tpu_custom_call.1} parent=39 // pred_check_branch
          %592 = sbr.rel (%p590) target = $region68
        $region67: #{tpu_custom_call.1} parent=39 // pred_region
          %s594 = ssub.s32 512, 512
          %595 = vsyncadd %s564, %s594
          %s596 = smul.addr %s34, 8
          %s597 = sadd.s32 %s35, %s596
          %s598 = smul.addr %s597, 128
          %s599 = scalar_lea.hbm %s6, %s598
          %s600 = sshll.u32 %s567, 4
          %s601 = int_to_ptr.vmem [resolvable:$true] %s600
          %606 = dma.vmem_to_hbm [thread:$0]  %s601, 512, %s599, %s564, 128, 256, 8
        $region68: #{tpu_custom_call.1} parent=39 // pred_fallthru
          _
        // Predicated region
        $region69: #{tpu_custom_call.1} parent=39 // pred_check
          %p607 = pneg %p230
        $region70: #{tpu_custom_call.1} parent=39 // pred_check_branch
          %609 = sbr.rel (%p607) target = $region72
        $region71: #{tpu_custom_call.1} parent=39 // pred_region
          %s611 = ssub.s32 512, 512
          %612 = vsyncadd %s569, %s611
          %s613 = smul.addr %s34, 8
          %s614 = sadd.s32 %s35, %s613
          %s615 = smul.addr %s614, 128
          %s616 = scalar_lea.hbm %s7, %s615
          %s617 = sshll.u32 %s572, 4
          %s618 = int_to_ptr.vmem [resolvable:$true] %s617
          %623 = dma.vmem_to_hbm [thread:$0]  %s618, 512, %s616, %s569, 128, 256, 8
        $region72: #{tpu_custom_call.1} parent=39 // pred_fallthru
          _
      $region40: #{tpu_custom_call.1} parent=5 // pred_fallthru
        _
      %p624 = scmp.le.s32.totalorder 2, %s25
      // Predicated region
      $region73: #{tpu_custom_call.1} parent=5 // pred_check
        %p625 = pneg %p624
      $region74: #{tpu_custom_call.1} parent=5 // pred_check_branch
        %627 = sbr.rel (%p625) target = $region76
      $region75: #{tpu_custom_call.1} parent=5 // pred_region
        %s628 = ssub.s32 %s25, 2
        // Predicated region
        $region77: #{tpu_custom_call.1} parent=75 // pred_check
          %p629 = pneg %p180
        $region78: #{tpu_custom_call.1} parent=75 // pred_check_branch
          %631 = sbr.rel (%p629) target = $region80
        $region79: #{tpu_custom_call.1} parent=75 // pred_region
          %s632 = sand.u32 %s165, 1
          %s633 = scalar_lea.sflag [#allocation4], %s632
          %s634 = sand.u32 %s165, 1
          %s635 = smul.addr %s634, 32
          %s636 = scalar_lea.vmem [#allocation11], %s635
          %637 = dma.done %s633, 512
        $region80: #{tpu_custom_call.1} parent=75 // pred_fallthru
          _
        // Predicated region
        $region81: #{tpu_custom_call.1} parent=75 // pred_check
          %p638 = pneg %p208
        $region82: #{tpu_custom_call.1} parent=75 // pred_check_branch
          %640 = sbr.rel (%p638) target = $region84
        $region83: #{tpu_custom_call.1} parent=75 // pred_region
          %s641 = sand.u32 %s31, 1
          %s642 = scalar_lea.sflag [#allocation13], %s641
          %s643 = sand.u32 %s193, 1
          %s644 = smul.addr %s643, 32
          %s645 = scalar_lea.vmem [#allocation12], %s644
          %646 = dma.done %s642, 512
        $region84: #{tpu_custom_call.1} parent=75 // pred_fallthru
          _
        // Predicated region
        $region85: #{tpu_custom_call.1} parent=75 // pred_check
          %p647 = pneg %p236
        $region86: #{tpu_custom_call.1} parent=75 // pred_check_branch
          %649 = sbr.rel (%p647) target = $region88
        $region87: #{tpu_custom_call.1} parent=75 // pred_region
          %s650 = sand.u32 %s31, 1
          %s651 = scalar_lea.sflag [#allocation13], %s650
          %s652 = sand.u32 %s221, 1
          %s653 = smul.addr %s652, 32
          %s654 = scalar_lea.vmem [#allocation14], %s653
          %655 = dma.done %s651, 512
        $region88: #{tpu_custom_call.1} parent=75 // pred_fallthru
          _
      $region76: #{tpu_custom_call.1} parent=5 // pred_fallthru
        _
    $region6: #{tpu_custom_call.1} parent=1 // loop_footer
      %s29 = sadd.s32 1, %s25
    $region7: #{tpu_custom_call.1} parent=1 // loop_footer_branch
      %24 = sbr.rel target = $region3
    $region8: #{tpu_custom_call.1} parent=1 // loop_exit
      _
    %656 = vsyncpa [#allocation3], 1
    %s657 = scalar_lea.sflag [#allocation3], 1
    %658 = vsyncpa %s657, 1
    %659 = vsyncpa [#allocation6], 1
    %660 = vsyncpa [#allocation9], 1
    %661 = vsyncpa [#allocation4], 1
    %s662 = scalar_lea.sflag [#allocation4], 1
    %663 = vsyncpa %s662, 1
    %664 = vsyncpa [#allocation13], 1
    %s665 = scalar_lea.sflag [#allocation13], 1
    %666 = vsyncpa %s665, 1

</llo_original>
